<compile_context>
chip_gen: v6e
topology: v6e:2x2x1
jax: 0.10.0
libtpu: 0.0.40
codegen_flags: <defaults>
</compile_context>

<pallas_src>
import functools

import jax
import jax.numpy as jnp
from jax import lax
from jax.experimental import pallas as pl
from jax.experimental.pallas import tpu as pltpu


# ----------------------------------------------------------------------------
# Pallas kernel
# ----------------------------------------------------------------------------
def _self_attention_kernel(x_ref, wh_ref, wfg_ref, bh_ref, bfg_ref, gamma_ref,
                           o_ref, ht_ref, f_ref, g_ref, *, att_channels, tq):
    """Grid = (batch, query-tile).  Refs (per grid step):

    x_ref:     (C, HW)   f32   NCHW-flattened activations (resident per batch)
    wh_ref:    (C, C)    bf16  torch Wh[out, in]
    wfg_ref:   (C, 2A)   bf16  columns = [Wf^T | Wg^T]
    bh_ref:    (C, 1)    f32
    bfg_ref:   (1, 2A)   f32   [bf | bg]
    gamma_ref: (1,)      f32   SMEM scalar
    o_ref:     (C, TQ)   f32   output tile (channels-first, lane-dense TQ)
    ht_ref:    (C, HW)   bf16  scratch: h^T over all keys
    f_ref:     (HW, A)   bf16  scratch: f over all queries
    g_ref:     (HW, A)   bf16  scratch: g over all keys
    """
    a = att_channels
    q = pl.program_id(1)

    # ---- once per batch element: fill the full-key projections into VMEM ----
    @pl.when(q == 0)
    def _fill():
        x_cf = x_ref[...]                                        # (C, HW) f32
        x_bf = x_cf.astype(jnp.bfloat16)
        # h^T = Wh @ x : channels-first, standard MXU form (bf16 in / f32 acc).
        ht = jnp.dot(wh_ref[...], x_bf,
                     preferred_element_type=jnp.float32) + bh_ref[...]
        ht_ref[...] = ht.astype(jnp.bfloat16)
        # f / g need spatial on sublanes: one per-batch XLU transpose of x.
        x_cl = jnp.transpose(x_cf, (1, 0)).astype(jnp.bfloat16)  # (HW, C)
        fg = jnp.dot(x_cl, wfg_ref[...],
                     preferred_element_type=jnp.float32) + bfg_ref[...]
        f_ref[...] = fg[:, :a].astype(jnp.bfloat16)
        g_ref[...] = fg[:, a:].astype(jnp.bfloat16)

    # ---- per query tile ----
    qs = pl.multiple_of(q * tq, tq)
    f_q = f_ref[pl.ds(qs, tq), :]                                # (TQ, A) bf16

    # logits[t, k] = sum_a f_q[t, a] * g[k, a]   (NT form, no explicit transpose)
    logits = lax.dot_general(f_q, g_ref[...], (((1,), (1,)), ((), ())),
                             preferred_element_type=jnp.float32)  # (TQ, HW) f32
    logits = logits - jnp.max(logits, axis=-1, keepdims=True)
    e = jnp.exp(logits)                                           # EUP
    inv = pl.reciprocal(jnp.sum(e, axis=-1, keepdims=True), approx=True)
    beta = (e * inv).astype(jnp.bfloat16)                         # (TQ, HW)

    # o^T[c, t] = sum_k h^T[c, k] * beta[t, k]   (NT form -> (C, TQ) directly)
    o_t = lax.dot_general(ht_ref[...], beta, (((1,), (1,)), ((), ())),
                          preferred_element_type=jnp.float32)     # (C, TQ) f32

    x_q = x_ref[:, pl.ds(qs, tq)]                                 # (C, TQ) f32
    o_ref[...] = (gamma_ref[0] * o_t + x_q).astype(o_ref.dtype)


# ----------------------------------------------------------------------------
# One-time parameter packing (call once at init, NOT per forward)
# ----------------------------------------------------------------------------
def pack_params(params):
    """torch-layout 1x1-conv params -> kernel-ready bf16 weights / f32 biases."""
    wh, wf, wg = params["wh"], params["wf"], params["wg"]
    C = wh.shape[0]
    A = wf.shape[0]
    return {
        "w_h": wh.reshape(C, C).astype(jnp.bfloat16),                      # (C, C)
        "w_fg": jnp.concatenate([wf.reshape(A, C).T, wg.reshape(A, C).T],
                                axis=1).astype(jnp.bfloat16),              # (C, 2A)
        "b_h": params["bh"].reshape(C, 1).astype(jnp.float32),
        "b_fg": jnp.concatenate([params["bf"], params["bg"]]
                                ).reshape(1, 2 * A).astype(jnp.float32),
        "gamma": params["gamma"].reshape(1).astype(jnp.float32),
    }


def _pick_tq(hw, target=256):
    """Largest multiple of 128 dividing hw, capped at `target`; else whole hw."""
    best = None
    t = 128
    while t <= min(hw, target):
        if hw % t == 0:
            best = t
        t += 128
    return best if best is not None else hw


# ----------------------------------------------------------------------------
# Forward wrapper (NCHW in / NCHW out — no layout transposes in the hot path)
# ----------------------------------------------------------------------------
def self_attention_2d(x_nchw, packed, *, tq=None):
    B, C, H, W = x_nchw.shape
    A = packed["w_fg"].shape[1] // 2
    assert A >= 1, "in_channels must be >= 8 (att_channels = C // 8)"
    assert C % 8 == 0, "channel count must be a multiple of 8"
    HW = H * W
    if tq is None:
        tq = _pick_tq(HW)
    assert HW % tq == 0 and (tq % 128 == 0 or tq == HW)
    nq = HW // tq

    x = x_nchw.reshape(B, C, HW)          # free reshape, stays channels-first

    # VMEM budget (inputs double-buffered) + generous temp headroom.
    est = (
        2 * C * HW * 4                    # x block
        + 2 * C * max(tq, 128) * 4        # output tile
        + 2 * (C * C + C * 2 * A) * 2     # bf16 weights
        + 2 * (C + 8) * 128 * 4           # lane-padded biases
        + C * HW * 2 + 2 * HW * 128 * 2   # persistent scratches
        + 4 * tq * HW * 4                 # logits / exp / beta temporaries
        + 3 * HW * C * 4                  # fill-time transpose / projection temps
    )
    vmem_limit = int(min(100 * 1024 * 1024, max(32 * 1024 * 1024, 2 * est)))

    kernel = functools.partial(_self_attention_kernel, att_channels=A, tq=tq)
    y = pl.pallas_call(
        kernel,
        out_shape=jax.ShapeDtypeStruct((B, C, HW), x.dtype),
        grid=(B, nq),
        in_specs=[
            pl.BlockSpec((None, C, HW), lambda b, q: (b, 0, 0)),   # resident per batch
            pl.BlockSpec((C, C), lambda b, q: (0, 0)),
            pl.BlockSpec((C, 2 * A), lambda b, q: (0, 0)),
            pl.BlockSpec((C, 1), lambda b, q: (0, 0)),
            pl.BlockSpec((1, 2 * A), lambda b, q: (0, 0)),
            pl.BlockSpec(memory_space=pltpu.MemorySpace.SMEM),     # gamma scalar
        ],
        out_specs=pl.BlockSpec((None, C, tq), lambda b, q: (b, 0, q)),
        scratch_shapes=[
            pltpu.VMEM((C, HW), jnp.bfloat16),    # h^T
            pltpu.VMEM((HW, A), jnp.bfloat16),    # f
            pltpu.VMEM((HW, A), jnp.bfloat16),    # g
        ],
        compiler_params=pltpu.CompilerParams(
            dimension_semantics=("parallel", "arbitrary"),
            vmem_limit_bytes=vmem_limit,
        ),
    )(x, packed["w_h"], packed["w_fg"], packed["b_h"], packed["b_fg"],
      packed["gamma"])

    return y.reshape(B, C, H, W)


# ----------------------------------------------------------------------------
# Pure-JAX reference (matches the PyTorch forward, f32 highest precision)
# ----------------------------------------------------------------------------
def self_attention_2d_ref(x_nchw, params):
    B, C, H, W = x_nchw.shape
    hi = jax.lax.Precision.HIGHEST
    xf = x_nchw.reshape(B, C, H * W)

    def conv1x1(w, b):
        return jnp.einsum("oc,bcp->bop", w.reshape(-1, C), xf, precision=hi) \
            + b[None, :, None]

    f = jnp.transpose(conv1x1(params["wf"], params["bf"]), (0, 2, 1))
    g = conv1x1(params["wg"], params["bg"])
    h = jnp.transpose(conv1x1(params["wh"], params["bh"]), (0, 2, 1))
    beta = jax.nn.softmax(jnp.einsum("bqa,bak->bqk", f, g, precision=hi), axis=2)
    o = jnp.einsum("bqk,bkc->bqc", beta, h, precision=hi)
    o = jnp.transpose(o, (0, 2, 1)).reshape(B, C, H, W)
    return params["gamma"][0] * o + x_nchw


# ----------------------------------------------------------------------------
# Driver
# ----------------------------------------------------------------------------
if __name__ == "__main__":
    key = jax.random.PRNGKey(0)
    kx, kwf, kwg, kwh, kbf, kbg, kbh = jax.random.split(key, 7)

    # C = 128 keeps channels a full sublane/lane multiple; H*W = 256 with
    # TQ = 128 exercises the query-tile loop and the once-per-batch scratch fill.
    B, C, H, W = 2, 128, 16, 16
    A = C // 8
    s = 0.05
    params = {
        "wf": jax.random.normal(kwf, (A, C, 1, 1), jnp.float32) * s,
        "wg": jax.random.normal(kwg, (A, C, 1, 1), jnp.float32) * s,
        "wh": jax.random.normal(kwh, (C, C, 1, 1), jnp.float32) * s,
        "bf": jax.random.normal(kbf, (A,), jnp.float32) * s,
        "bg": jax.random.normal(kbg, (A,), jnp.float32) * s,
        "bh": jax.random.normal(kbh, (C,), jnp.float32) * s,
        # torch initializes gamma to 0; use nonzero so the attention path is tested.
        "gamma": jnp.array([0.5], jnp.float32),
    }
    x = jax.random.normal(kx, (B, C, H, W), jnp.float32)

    packed = pack_params(params)                          # one-time packing
    fwd = jax.jit(self_attention_2d, static_argnames=("tq",))

    y = jax.block_until_ready(fwd(x, packed, tq=128))
    assert y.shape == (B, C, H, W)
    assert bool(jnp.all(jnp.isfinite(y)))

    # Self-check vs. the f32 reference (tolerance covers bf16 MXU operands and
    # the approx EUP reciprocal in the softmax normalization).
    y_ref = self_attention_2d_ref(x, params)
    err = float(jnp.max(jnp.abs(y - y_ref)))
    assert err < 5e-2, f"mismatch vs reference: max abs err {err}"

    print("KERNEL_OK")
</pallas_src>

<mosaic_0001>
module attributes {stable_mosaic.version = 11 : i64} {
  func.func @_self_attention_kernel(%arg0: i32, %arg1: i32, %arg2: memref<1x128x256xf32, #tpu.memory_space<vmem>>, %arg3: memref<128x128xbf16, #tpu.memory_space<vmem>>, %arg4: memref<128x32xbf16, #tpu.memory_space<vmem>>, %arg5: memref<128x1xf32, #tpu.memory_space<vmem>>, %arg6: memref<1x32xf32, #tpu.memory_space<vmem>>, %arg7: memref<1xf32, #tpu.memory_space<smem>>, %arg8: memref<1x128x128xf32, #tpu.memory_space<vmem>>, %arg9: memref<128x256xbf16, #tpu.memory_space<vmem>>, %arg10: memref<256x16xbf16, #tpu.memory_space<vmem>>, %arg11: memref<256x16xbf16, #tpu.memory_space<vmem>>) attributes {dimension_semantics = [#tpu.dimension_semantics<parallel>, #tpu.dimension_semantics<arbitrary>], iteration_bounds = array<i64: 2, 2>, scalar_prefetch = 0 : i64, scratch_operands = 3 : i64, tpu.core_type = #tpu.core_type<tc>, window_params = [{transform_indices = @transform_0, window_bounds = array<i64: 1, 128, 256>}, {pipeline_mode = #tpu.pipeline_mode<synchronous>, transform_indices = @transform_1, window_bounds = array<i64: 128, 128>}, {pipeline_mode = #tpu.pipeline_mode<synchronous>, transform_indices = @transform_2, window_bounds = array<i64: 128, 32>}, {pipeline_mode = #tpu.pipeline_mode<synchronous>, transform_indices = @transform_3, window_bounds = array<i64: 128, 1>}, {pipeline_mode = #tpu.pipeline_mode<synchronous>, transform_indices = @transform_4, window_bounds = array<i64: 1, 32>}, {transform_indices = @transform_5, window_bounds = array<i64: 1>}, {transform_indices = @transform_6, window_bounds = array<i64: 1, 128, 128>}]} {
    %c0_i32 = arith.constant 0 : i32
    %0 = arith.cmpi eq, %arg1, %c0_i32 : i32
    %1 = arith.extui %0 : i1 to i32
    %c0_i32_0 = arith.constant 0 : i32
    %2 = arith.cmpi ne, %1, %c0_i32_0 : i32
    scf.if %2 {
      %c0_14 = arith.constant 0 : index
      %c0_15 = arith.constant 0 : index
      %c0_16 = arith.constant 0 : index
      %32 = vector.load %arg2[%c0_14, %c0_15, %c0_16] : memref<1x128x256xf32, #tpu.memory_space<vmem>>, vector<1x128x256xf32>
      %33 = vector.shape_cast %32 : vector<1x128x256xf32> to vector<128x256xf32>
      %34 = arith.truncf %33 : vector<128x256xf32> to vector<128x256xbf16>
      %c0_17 = arith.constant 0 : index
      %c0_18 = arith.constant 0 : index
      %35 = vector.load %arg3[%c0_17, %c0_18] : memref<128x128xbf16, #tpu.memory_space<vmem>>, vector<128x128xbf16>
      %cst_19 = arith.constant dense<0.000000e+00> : vector<128x256xf32>
      %36 = tpu.matmul %35, %34, %cst_19 {dimension_numbers = #tpu.dot_dimension_numbers<[1], [0], [0], [1], [0, 0, 1, 1], [], []>} : vector<128x128xbf16>, vector<128x256xbf16>, vector<128x256xf32> -> vector<128x256xf32>
      %c0_20 = arith.constant 0 : index
      %c0_21 = arith.constant 0 : index
      %37 = vector.load %arg5[%c0_20, %c0_21] : memref<128x1xf32, #tpu.memory_space<vmem>>, vector<128x1xf32>
      %38 = vector.broadcast %37 : vector<128x1xf32> to vector<128x256xf32>
      %39 = arith.addf %36, %38 : vector<128x256xf32>
      %40 = arith.truncf %39 : vector<128x256xf32> to vector<128x256xbf16>
      %c0_22 = arith.constant 0 : index
      %c0_23 = arith.constant 0 : index
      %41 = vector.load %arg9[%c0_22, %c0_23] : memref<128x256xbf16, #tpu.memory_space<vmem>>, vector<128x256xbf16>
      tpu.vector_store %arg9[%c0_22, %c0_23], %40 {strides = array<i32>} : memref<128x256xbf16, #tpu.memory_space<vmem>>, vector<128x256xbf16>,
      %42 = tpu.transpose %33, [1, 0] : vector<128x256xf32> -> vector<256x128xf32>
      %43 = arith.truncf %42 : vector<256x128xf32> to vector<256x128xbf16>
      %c0_24 = arith.constant 0 : index
      %c0_25 = arith.constant 0 : index
      %44 = vector.load %arg4[%c0_24, %c0_25] : memref<128x32xbf16, #tpu.memory_space<vmem>>, vector<128x32xbf16>
      %cst_26 = arith.constant dense<0.000000e+00> : vector<256x32xf32>
      %45 = tpu.matmul %43, %44, %cst_26 {dimension_numbers = #tpu.dot_dimension_numbers<[1], [0], [0], [1], [0, 0, 1, 1], [], []>} : vector<256x128xbf16>, vector<128x32xbf16>, vector<256x32xf32> -> vector<256x32xf32>
      %c0_27 = arith.constant 0 : index
      %c0_28 = arith.constant 0 : index
      %46 = vector.load %arg6[%c0_27, %c0_28] : memref<1x32xf32, #tpu.memory_space<vmem>>, vector<1x32xf32>
      %47 = vector.broadcast %46 : vector<1x32xf32> to vector<256x32xf32>
      %48 = arith.addf %45, %47 : vector<256x32xf32>
      %49 = vector.extract_strided_slice %48 {offsets = [0, 0], sizes = [256, 16], strides = [1, 1]} : vector<256x32xf32> to vector<256x16xf32>
      %50 = arith.truncf %49 : vector<256x16xf32> to vector<256x16xbf16>
      %c0_29 = arith.constant 0 : index
      %c0_30 = arith.constant 0 : index
      %51 = vector.load %arg10[%c0_29, %c0_30] : memref<256x16xbf16, #tpu.memory_space<vmem>>, vector<256x16xbf16>
      tpu.vector_store %arg10[%c0_29, %c0_30], %50 {strides = array<i32>} : memref<256x16xbf16, #tpu.memory_space<vmem>>, vector<256x16xbf16>,
      %52 = vector.extract_strided_slice %48 {offsets = [0, 16], sizes = [256, 16], strides = [1, 1]} : vector<256x32xf32> to vector<256x16xf32>
      %53 = arith.truncf %52 : vector<256x16xf32> to vector<256x16xbf16>
      %c0_31 = arith.constant 0 : index
      %c0_32 = arith.constant 0 : index
      %54 = vector.load %arg11[%c0_31, %c0_32] : memref<256x16xbf16, #tpu.memory_space<vmem>>, vector<256x16xbf16>
      tpu.vector_store %arg11[%c0_31, %c0_32], %53 {strides = array<i32>} : memref<256x16xbf16, #tpu.memory_space<vmem>>, vector<256x16xbf16>,
    } else {
    }
    %c128_i32 = arith.constant 128 : i32
    %3 = arith.muli %arg1, %c128_i32 : i32
    %4 = tpu.assume_multiple %3, 128 : i32
    %5 = arith.index_cast %4 : i32 to index
    %c0 = arith.constant 0 : index
    %6 = vector.load %arg10[%5, %c0] : memref<256x16xbf16, #tpu.memory_space<vmem>>, vector<128x16xbf16>
    %c0_1 = arith.constant 0 : index
    %c0_2 = arith.constant 0 : index
    %7 = vector.load %arg11[%c0_1, %c0_2] : memref<256x16xbf16, #tpu.memory_space<vmem>>, vector<256x16xbf16>
    %cst = arith.constant dense<0.000000e+00> : vector<128x256xf32>
    %8 = tpu.matmul %6, %7, %cst {dimension_numbers = #tpu.dot_dimension_numbers<[1], [1], [0], [0], [0, 0, 1, 0], [], []>} : vector<128x16xbf16>, vector<256x16xbf16>, vector<128x256xf32> -> vector<128x256xf32>
    %cst_3 = arith.constant dense<0xFF800000> : vector<128xf32>
    %9 = vector.multi_reduction <maximumf>, %8, %cst_3 [1] : vector<128x256xf32> to vector<128xf32>
    %10 = vector.shape_cast %9 : vector<128xf32> to vector<128x1xf32>
    %11 = vector.broadcast %10 : vector<128x1xf32> to vector<128x256xf32>
    %12 = arith.subf %8, %11 : vector<128x256xf32>
    %13 = math.exp %12 : vector<128x256xf32>
    %cst_4 = arith.constant dense<0.000000e+00> : vector<128xf32>
    %14 = vector.multi_reduction <add>, %13, %cst_4 [1] : vector<128x256xf32> to vector<128xf32>
    %15 = vector.shape_cast %14 : vector<128xf32> to vector<128x1xf32>
    %16 = tpu.reciprocal %15 {approx = true} : vector<128x1xf32> -> vector<128x1xf32>
    %17 = vector.broadcast %16 : vector<128x1xf32> to vector<128x256xf32>
    %18 = arith.mulf %13, %17 : vector<128x256xf32>
    %19 = arith.truncf %18 : vector<128x256xf32> to vector<128x256xbf16>
    %c0_5 = arith.constant 0 : index
    %c0_6 = arith.constant 0 : index
    %20 = vector.load %arg9[%c0_5, %c0_6] : memref<128x256xbf16, #tpu.memory_space<vmem>>, vector<128x256xbf16>
    %cst_7 = arith.constant dense<0.000000e+00> : vector<128x128xf32>
    %21 = tpu.matmul %20, %19, %cst_7 {dimension_numbers = #tpu.dot_dimension_numbers<[1], [1], [0], [0], [0, 0, 1, 0], [], []>} : vector<128x256xbf16>, vector<128x256xbf16>, vector<128x128xf32> -> vector<128x128xf32>
    %c0_8 = arith.constant 0 : index
    %c0_9 = arith.constant 0 : index
    %22 = arith.index_cast %4 : i32 to index
    %23 = vector.load %arg2[%c0_8, %c0_9, %22] : memref<1x128x256xf32, #tpu.memory_space<vmem>>, vector<1x128x128xf32>
    %24 = vector.shape_cast %23 : vector<1x128x128xf32> to vector<128x128xf32>
    %c0_10 = arith.constant 0 : index
    %25 = memref.load %arg7[%c0_10] : memref<1xf32, #tpu.memory_space<smem>>
    %26 = vector.broadcast %25 : f32 to vector<128x128xf32>
    %27 = arith.mulf %26, %21 : vector<128x128xf32>
    %28 = arith.addf %27, %24 : vector<128x128xf32>
    %c0_11 = arith.constant 0 : index
    %c0_12 = arith.constant 0 : index
    %c0_13 = arith.constant 0 : index
    %29 = vector.load %arg8[%c0_11, %c0_12, %c0_13] : memref<1x128x128xf32, #tpu.memory_space<vmem>>, vector<1x128x128xf32>
    %30 = vector.shape_cast %29 : vector<1x128x128xf32> to vector<128x128xf32>
    %31 = vector.shape_cast %28 : vector<128x128xf32> to vector<1x128x128xf32>
    tpu.vector_store %arg8[%c0_11, %c0_12, %c0_13], %31 {strides = array<i32>} : memref<1x128x128xf32, #tpu.memory_space<vmem>>, vector<1x128x128xf32>,
    return
  }
  func.func @transform_0(%arg0: i32, %arg1: i32) -> (i32, i32, i32) {
    %c0_i32 = arith.constant 0 : i32
    %c0_i32_0 = arith.constant 0 : i32
    %c0_i32_1 = arith.constant 0 : i32
    return %arg0, %c0_i32, %c0_i32_0 : i32, i32, i32
  }
  func.func @transform_1(%arg0: i32, %arg1: i32) -> (i32, i32) {
    %c0_i32 = arith.constant 0 : i32
    %c0_i32_0 = arith.constant 0 : i32
    %c0_i32_1 = arith.constant 0 : i32
    return %c0_i32, %c0_i32_0 : i32, i32
  }
  func.func @transform_2(%arg0: i32, %arg1: i32) -> (i32, i32) {
    %c0_i32 = arith.constant 0 : i32
    %c0_i32_0 = arith.constant 0 : i32
    %c0_i32_1 = arith.constant 0 : i32
    return %c0_i32, %c0_i32_0 : i32, i32
  }
  func.func @transform_3(%arg0: i32, %arg1: i32) -> (i32, i32) {
    %c0_i32 = arith.constant 0 : i32
    %c0_i32_0 = arith.constant 0 : i32
    %c0_i32_1 = arith.constant 0 : i32
    return %c0_i32, %c0_i32_0 : i32, i32
  }
  func.func @transform_4(%arg0: i32, %arg1: i32) -> (i32, i32) {
    %c0_i32 = arith.constant 0 : i32
    %c0_i32_0 = arith.constant 0 : i32
    %c0_i32_1 = arith.constant 0 : i32
    return %c0_i32, %c0_i32_0 : i32, i32
  }
  func.func @transform_5(%arg0: i32, %arg1: i32) -> i32 {
    %c0_i32 = arith.constant 0 : i32
    %c0_i32_0 = arith.constant 0 : i32
    return %c0_i32 : i32
  }
  func.func @transform_6(%arg0: i32, %arg1: i32) -> (i32, i32, i32) {
    %c0_i32 = arith.constant 0 : i32
    %c0_i32_0 = arith.constant 0 : i32
    return %arg0, %c0_i32, %arg1 : i32, i32, i32
  }
}

</mosaic_0001>

<llo_original>
// kernel: self_attention_2d.1
$region0: #{self_attention_2d.1}
  #allocation0 [shape = 'u32[]', space=smem, size = 0x4, offset = 0x4, fixed_abs, tag = 'smem constant byte address 0x4 - core index']
  #allocation1 [shape = 'u32[144,128]{1,0:T(1,128)}', space=vmem, size = 0x12000, scoped, tag = 'internal scratch']
  #allocation2 [shape = 'bf16[128,256]{1,0:T(8,128)(2,1)}', space=vmem, size = 0x10000, scoped, tag = 'scratch operand']
  #allocation3 [shape = 'bf16[256,16]{1,0:T(8,128)(2,1)}', space=vmem, size = 0x10000, scoped, tag = 'scratch operand']
  #allocation4 [shape = 'bf16[256,16]{1,0:T(8,128)(2,1)}', space=vmem, size = 0x10000, scoped, tag = 'scratch operand']
  #allocation5 [shape = 'f32[1]{0:T(128)S(6)}', space=smem, size = 0x200, scoped, tag = 'scoped memory for self_attention_2d.1']
  %s0 = inlined_call_operand.vmem [shape: f32[2,128,256], index: 0, kind: input, shape index: {}]
  %s1 = inlined_call_operand.vmem [shape: bf16[128,128], index: 1, kind: input, shape index: {}]
  %s2 = inlined_call_operand.vmem [shape: bf16[128,32], index: 2, kind: input, shape index: {}]
  %s3 = inlined_call_operand.vmem [shape: f32[128,1], index: 3, kind: input, shape index: {}]
  %s4 = inlined_call_operand.vmem [shape: f32[1,32], index: 4, kind: input, shape index: {}]
  %s5 = inlined_call_operand.<no memory space> [shape: f32[1], index: 5, kind: input, shape index: {}]
  %s6 = inlined_call_operand.vmem [shape: f32[2,128,256], index: 6, kind: output, shape index: {}]
  %s7 = sld [smem:[#allocation0]]
  $region95: #{self_attention_2d.1} parent=0
    _
  %s9 = ssub.s32 1, %s7
  %s10 = scalar_select 0, %s9, %s7
  %11 = sst [smem:[#allocation5]] %s5
  $region1: #{self_attention_2d.1} parent=0
    #allocation6 [shape = 'u8[131072]{0}', space=vmem, size = 0x20000, scoped, tag = 'output window, operand 0']
    loop: start=0, step=1, limit=6
    $region2: #{self_attention_2d.1} parent=1 // loop_pre_header
      _
    $region3: #{self_attention_2d.1} parent=1 // loop_header
      %s13 = sphi 0, %s17
      %p14 = scmp.ge.s32.totalorder %s13, 6
      %s20 = sphi 0, %s32
      %s21 = sphi 0, %s28
      %s22 = sphi 0, %s20
      %s23 = sphi 0, %s21
      %s24 = sphi 0, %s22
      %s25 = sphi 0, %s23
      %s35 = sphi 0, %s37
      %s38 = sphi 0, %s35
      %s39 = sphi 0, %s38
      %s55 = sphi 0, %s39
      %s59 = sphi 0, %s59
      %s61 = sphi 0, %s59
      %s62 = sphi 0, %s61
      %s76 = sphi 0, %s62
      %s80 = sphi 0, %s80
      %s82 = sphi 0, %s80
      %s83 = sphi 0, %s82
      %s97 = sphi 0, %s83
      %s101 = sphi 0, %s101
      %s103 = sphi 0, %s101
      %s104 = sphi 0, %s103
      %s118 = sphi 0, %s104
      %s122 = sphi 0, %s122
      %s124 = sphi 0, %s122
      %s125 = sphi 0, %s124
      %s139 = sphi 0, %s125
      %s143 = sphi 0, %s143
      %s145 = sphi 0, %s143
      %s146 = sphi 0, %s145
      %s160 = sphi 0, %s146
      %s168 = sphi 0, %s170
      %s171 = sphi 0, %s168
      %s172 = sphi 0, %s171
      %s188 = sphi 0, %s172
    $region4: #{self_attention_2d.1} parent=1 // loop_header_branch
      %16 = sbr.rel (%p14) target = $region8
    $region5: #{self_attention_2d.1} parent=1 // loop_body
      %s18 = ssub.s32 %s13, 1
      %s19 = ssub.s32 %s13, 2
      %s26 = sadd.s32 1, %s21
      %p27 = scmp.ge.s32.totalorder %s26, 2
      %s28 = scalar_select %p27, 0, %s26
      %s29 = sadd.s32 1, %s20
      %s30 = scalar_select %p27, %s29, %s20
      %p31 = scmp.ge.s32.totalorder %s30, 2
      %s32 = scalar_select %p31, 0, %s30
      %s33 = ssub.s32 %s20, %s32
      %p34 = scmp.eq.s32.totalorder %s33, 0
      %s36 = sadd.s32 %s35, 1
      %s37 = scalar_select %p34, %s35, %s36
      %p40 = pneg %p34
      %p41 = scmp.eq.s32.totalorder %s13, 3
      %p42 = por %p40, %p41
      %p43 = scmp.ne.s32.totalorder %s35, %s38
      %p44 = scmp.eq.s32.totalorder %s13, 0
      %p45 = por %p43, %p44
      %p46 = scmp.ne.s32.totalorder %s35, %s38
      %p47 = scmp.eq.s32.totalorder %s18, 3
      %p48 = por %p46, %p47
      %p49 = scmp.ne.s32.totalorder %s38, %s39
      %p50 = scmp.eq.s32.totalorder %s18, 0
      %p51 = por %p49, %p50
      %p52 = scmp.ne.s32.totalorder %s38, %s39
      %p53 = scmp.eq.s32.totalorder %s19, 3
      %p54 = por %p52, %p53
      %p56 = scmp.ne.s32.totalorder %s39, %s55
      %p57 = scmp.eq.s32.totalorder %s19, 0
      %p58 = por %p56, %p57
      %s60 = sadd.s32 %s59, 1
      %p63 = scmp.eq.s32.totalorder %s13, 3
      %p64 = scmp.ne.s32.totalorder %s59, %s61
      %p65 = scmp.eq.s32.totalorder %s13, 0
      %p66 = por %p64, %p65
      %p67 = scmp.ne.s32.totalorder %s59, %s61
      %p68 = scmp.eq.s32.totalorder %s18, 3
      %p69 = por %p67, %p68
      %p70 = scmp.ne.s32.totalorder %s61, %s62
      %p71 = scmp.eq.s32.totalorder %s18, 0
      %p72 = por %p70, %p71
      %p73 = scmp.ne.s32.totalorder %s61, %s62
      %p74 = scmp.eq.s32.totalorder %s19, 3
      %p75 = por %p73, %p74
      %p77 = scmp.ne.s32.totalorder %s62, %s76
      %p78 = scmp.eq.s32.totalorder %s19, 0
      %p79 = por %p77, %p78
      %s81 = sadd.s32 %s80, 1
      %p84 = scmp.eq.s32.totalorder %s13, 3
      %p85 = scmp.ne.s32.totalorder %s80, %s82
      %p86 = scmp.eq.s32.totalorder %s13, 0
      %p87 = por %p85, %p86
      %p88 = scmp.ne.s32.totalorder %s80, %s82
      %p89 = scmp.eq.s32.totalorder %s18, 3
      %p90 = por %p88, %p89
      %p91 = scmp.ne.s32.totalorder %s82, %s83
      %p92 = scmp.eq.s32.totalorder %s18, 0
      %p93 = por %p91, %p92
      %p94 = scmp.ne.s32.totalorder %s82, %s83
      %p95 = scmp.eq.s32.totalorder %s19, 3
      %p96 = por %p94, %p95
      %p98 = scmp.ne.s32.totalorder %s83, %s97
      %p99 = scmp.eq.s32.totalorder %s19, 0
      %p100 = por %p98, %p99
      %s102 = sadd.s32 %s101, 1
      %p105 = scmp.eq.s32.totalorder %s13, 3
      %p106 = scmp.ne.s32.totalorder %s101, %s103
      %p107 = scmp.eq.s32.totalorder %s13, 0
      %p108 = por %p106, %p107
      %p109 = scmp.ne.s32.totalorder %s101, %s103
      %p110 = scmp.eq.s32.totalorder %s18, 3
      %p111 = por %p109, %p110
      %p112 = scmp.ne.s32.totalorder %s103, %s104
      %p113 = scmp.eq.s32.totalorder %s18, 0
      %p114 = por %p112, %p113
      %p115 = scmp.ne.s32.totalorder %s103, %s104
      %p116 = scmp.eq.s32.totalorder %s19, 3
      %p117 = por %p115, %p116
      %p119 = scmp.ne.s32.totalorder %s104, %s118
      %p120 = scmp.eq.s32.totalorder %s19, 0
      %p121 = por %p119, %p120
      %s123 = sadd.s32 %s122, 1
      %p126 = scmp.eq.s32.totalorder %s13, 3
      %p127 = scmp.ne.s32.totalorder %s122, %s124
      %p128 = scmp.eq.s32.totalorder %s13, 0
      %p129 = por %p127, %p128
      %p130 = scmp.ne.s32.totalorder %s122, %s124
      %p131 = scmp.eq.s32.totalorder %s18, 3
      %p132 = por %p130, %p131
      %p133 = scmp.ne.s32.totalorder %s124, %s125
      %p134 = scmp.eq.s32.totalorder %s18, 0
      %p135 = por %p133, %p134
      %p136 = scmp.ne.s32.totalorder %s124, %s125
      %p137 = scmp.eq.s32.totalorder %s19, 3
      %p138 = por %p136, %p137
      %p140 = scmp.ne.s32.totalorder %s125, %s139
      %p141 = scmp.eq.s32.totalorder %s19, 0
      %p142 = por %p140, %p141
      %s144 = sadd.s32 %s143, 1
      %p147 = scmp.eq.s32.totalorder %s13, 3
      %p148 = scmp.ne.s32.totalorder %s143, %s145
      %p149 = scmp.eq.s32.totalorder %s13, 0
      %p150 = por %p148, %p149
      %p151 = scmp.ne.s32.totalorder %s143, %s145
      %p152 = scmp.eq.s32.totalorder %s18, 3
      %p153 = por %p151, %p152
      %p154 = scmp.ne.s32.totalorder %s145, %s146
      %p155 = scmp.eq.s32.totalorder %s18, 0
      %p156 = por %p154, %p155
      %p157 = scmp.ne.s32.totalorder %s145, %s146
      %p158 = scmp.eq.s32.totalorder %s19, 3
      %p159 = por %p157, %p158
      %p161 = scmp.ne.s32.totalorder %s146, %s160
      %p162 = scmp.eq.s32.totalorder %s19, 0
      %p163 = por %p161, %p162
      %s164 = ssub.s32 %s20, %s32
      %s165 = ssub.s32 %s21, %s28
      %s166 = sor.u32 %s164, %s165
      %p167 = scmp.eq.s32.totalorder %s166, 0
      %s169 = sadd.s32 %s168, 1
      %s170 = scalar_select %p167, %s168, %s169
      %p173 = pneg %p167
      %p174 = scmp.eq.s32.totalorder %s13, 3
      %p175 = por %p173, %p174
      %p176 = scmp.ne.s32.totalorder %s168, %s171
      %p177 = scmp.eq.s32.totalorder %s13, 0
      %p178 = por %p176, %p177
      %p179 = scmp.ne.s32.totalorder %s168, %s171
      %p180 = scmp.eq.s32.totalorder %s18, 3
      %p181 = por %p179, %p180
      %p182 = scmp.ne.s32.totalorder %s171, %s172
      %p183 = scmp.eq.s32.totalorder %s18, 0
      %p184 = por %p182, %p183
      %p185 = scmp.ne.s32.totalorder %s171, %s172
      %p186 = scmp.eq.s32.totalorder %s19, 3
      %p187 = por %p185, %p186
      %p189 = scmp.ne.s32.totalorder %s172, %s188
      %p190 = scmp.eq.s32.totalorder %s19, 0
      %p191 = por %p189, %p190
      %p192 = scmp.le.s32.totalorder 1, %s13
      %p193 = scmp.lt.s32.totalorder %s13, 5
      %p194 = pnand %p192, %p193
      %p195 = pneg %p194
      // Predicated region
      $region9: #{self_attention_2d.1} parent=5 // pred_check
        _
      $region10: #{self_attention_2d.1} parent=5 // pred_check_branch
        %197 = sbr.rel (%p194) target = $region12
      $region11: #{self_attention_2d.1} parent=5 // pred_region
        %s198 = ssub.s32 %s13, 1
        // Predicated region
        $region13: #{self_attention_2d.1} parent=11 // pred_check
          %p199 = pneg %p72
        $region14: #{self_attention_2d.1} parent=11 // pred_check_branch
          %201 = sbr.rel (%p199) target = $region16
        $region15: #{self_attention_2d.1} parent=11 // pred_region
          _
        $region16: #{self_attention_2d.1} parent=11 // pred_fallthru
          _
        // Predicated region
        $region17: #{self_attention_2d.1} parent=11 // pred_check
          %p202 = pneg %p93
        $region18: #{self_attention_2d.1} parent=11 // pred_check_branch
          %204 = sbr.rel (%p202) target = $region20
        $region19: #{self_attention_2d.1} parent=11 // pred_region
          _
        $region20: #{self_attention_2d.1} parent=11 // pred_fallthru
          _
        // Predicated region
        $region21: #{self_attention_2d.1} parent=11 // pred_check
          %p205 = pneg %p114
        $region22: #{self_attention_2d.1} parent=11 // pred_check_branch
          %207 = sbr.rel (%p205) target = $region24
        $region23: #{self_attention_2d.1} parent=11 // pred_region
          _
        $region24: #{self_attention_2d.1} parent=11 // pred_fallthru
          _
        // Predicated region
        $region25: #{self_attention_2d.1} parent=11 // pred_check
          %p208 = pneg %p135
        $region26: #{self_attention_2d.1} parent=11 // pred_check_branch
          %210 = sbr.rel (%p208) target = $region28
        $region27: #{self_attention_2d.1} parent=11 // pred_region
          _
        $region28: #{self_attention_2d.1} parent=11 // pred_fallthru
          _
        // Predicated region
        $region29: #{self_attention_2d.1} parent=11 // pred_check
          %p211 = pneg %p156
        $region30: #{self_attention_2d.1} parent=11 // pred_check_branch
          %213 = sbr.rel (%p211) target = $region32
        $region31: #{self_attention_2d.1} parent=11 // pred_region
          _
        $region32: #{self_attention_2d.1} parent=11 // pred_fallthru
          _
      $region12: #{self_attention_2d.1} parent=5 // pred_fallthru
        _
      %p214 = scmp.lt.s32.totalorder %s13, 4
      // Predicated region
      $region33: #{self_attention_2d.1} parent=5 // pred_check
        %p215 = pneg %p214
      $region34: #{self_attention_2d.1} parent=5 // pred_check_branch
        %217 = sbr.rel (%p215) target = $region36
      $region35: #{self_attention_2d.1} parent=5 // pred_region
        // Predicated region
        $region37: #{self_attention_2d.1} parent=35 // pred_check
          %p218 = pneg %p45
        $region38: #{self_attention_2d.1} parent=35 // pred_check_branch
          %220 = sbr.rel (%p218) target = $region40
        $region39: #{self_attention_2d.1} parent=35 // pred_region
          %p221 = scmp.lt.s32.totalorder %s20, 1
          %s222 = scalar_select %p221, %s20, 1
          %s223 = smul.addr %s222, 32
          %s224 = smul.addr %s223, 8
          %s225 = scalar_lea.vmem %s0, %s224
        $region40: #{self_attention_2d.1} parent=35 // pred_fallthru
          _
      $region36: #{self_attention_2d.1} parent=5 // pred_fallthru
        _
      %p226 = scmp.le.s32.totalorder 1, %s13
      %p227 = scmp.lt.s32.totalorder %s13, 5
      %p228 = pnand %p226, %p227
      %p229 = pneg %p228
      // Predicated region
      $region41: #{self_attention_2d.1} parent=5 // pred_check
        _
      $region42: #{self_attention_2d.1} parent=5 // pred_check_branch
        %231 = sbr.rel (%p228) target = $region44
      $region43: #{self_attention_2d.1} parent=5 // pred_region
        %s232 = ssub.s32 %s13, 1
        %p233 = scmp.lt.s32.totalorder %s22, 1
        %s234 = scalar_select %p233, %s22, 1
        %s235 = smul.addr %s234, 32
        %s236 = smul.addr %s235, 8
        %s237 = scalar_lea.vmem %s0, %s236
        %p238 = pneg %p51
        %p239 = pneg %p48
        %p240 = pneg %p72
        %p241 = pneg %p69
        %p242 = pneg %p93
        %p243 = pneg %p90
        %p244 = pneg %p114
        %p245 = pneg %p111
        %p246 = pneg %p135
        %p247 = pneg %p132
        %p248 = pneg %p156
        %p249 = pneg %p153
        %p250 = pneg %p184
        %p251 = pneg %p181
        %s252 = sand.u32 %s171, 1
        %s253 = sand.u32 %s171, 1
        %s254 = smul.addr %s253, 128
        %s255 = scalar_lea.vmem [#allocation6], %s254
        %p256 = scmp.lt.s32.totalorder %s22, 1
        %s257 = scalar_select %p256, %s22, 1
        %s258 = smul.addr %s257, 32
        %s259 = smul.addr %s258, 8
        %s260 = scalar_lea.vmem %s0, %s259
        %p262 = scmp.eq.s32.totalorder %s23, 0
        // Predicated region
        $region45: #{self_attention_2d.1} parent=43 // pred_check
          %p263 = pneg %p262
        $region46: #{self_attention_2d.1} parent=43 // pred_check_branch
          %265 = sbr.rel (%p263) target = $region48
        $region47: #{self_attention_2d.1} parent=43 // pred_region
          %v266 = vld [vmem:[%s260] sm:$0xff]
          %v267 = vld [vmem:[%s260 + $0x8] sm:$0xff]
          %v268 = vld [vmem:[%s260 + $0x10] sm:$0xff]
          %v269 = vld [vmem:[%s260 + $0x18] sm:$0xff]
          %v270 = vld [vmem:[%s260 + $0x20] sm:$0xff]
          %v271 = vld [vmem:[%s260 + $0x28] sm:$0xff]
          %v272 = vld [vmem:[%s260 + $0x30] sm:$0xff]
          %v273 = vld [vmem:[%s260 + $0x38] sm:$0xff]
          %v274 = vld [vmem:[%s260 + $0x40] sm:$0xff]
          %v275 = vld [vmem:[%s260 + $0x48] sm:$0xff]
          %v276 = vld [vmem:[%s260 + $0x50] sm:$0xff]
          %v277 = vld [vmem:[%s260 + $0x58] sm:$0xff]
          %v278 = vld [vmem:[%s260 + $0x60] sm:$0xff]
          %v279 = vld [vmem:[%s260 + $0x68] sm:$0xff]
          %v280 = vld [vmem:[%s260 + $0x70] sm:$0xff]
          %v281 = vld [vmem:[%s260 + $0x78] sm:$0xff]
          %v282 = vld [vmem:[%s260 + $0x80] sm:$0xff]
          %v283 = vld [vmem:[%s260 + $0x88] sm:$0xff]
          %v284 = vld [vmem:[%s260 + $0x90] sm:$0xff]
          %v285 = vld [vmem:[%s260 + $0x98] sm:$0xff]
          %v286 = vld [vmem:[%s260 + $0xa0] sm:$0xff]
          %v287 = vld [vmem:[%s260 + $0xa8] sm:$0xff]
          %v288 = vld [vmem:[%s260 + $0xb0] sm:$0xff]
          %v289 = vld [vmem:[%s260 + $0xb8] sm:$0xff]
          %v290 = vld [vmem:[%s260 + $0xc0] sm:$0xff]
          %v291 = vld [vmem:[%s260 + $0xc8] sm:$0xff]
          %v292 = vld [vmem:[%s260 + $0xd0] sm:$0xff]
          %v293 = vld [vmem:[%s260 + $0xd8] sm:$0xff]
          %v294 = vld [vmem:[%s260 + $0xe0] sm:$0xff]
          %v295 = vld [vmem:[%s260 + $0xe8] sm:$0xff]
          %v296 = vld [vmem:[%s260 + $0xf0] sm:$0xff]
          %v297 = vld [vmem:[%s260 + $0xf8] sm:$0xff]
          %v298 = vpack.c.bf16 %v268, %v266
          %v299 = vpack.c.bf16 %v269, %v267
          %v300 = vpack.c.bf16 %v272, %v270
          %v301 = vpack.c.bf16 %v273, %v271
          %v302 = vpack.c.bf16 %v276, %v274
          %v303 = vpack.c.bf16 %v277, %v275
          %v304 = vpack.c.bf16 %v280, %v278
          %v305 = vpack.c.bf16 %v281, %v279
          %v306 = vpack.c.bf16 %v284, %v282
          %v307 = vpack.c.bf16 %v285, %v283
          %v308 = vpack.c.bf16 %v288, %v286
          %v309 = vpack.c.bf16 %v289, %v287
          %v310 = vpack.c.bf16 %v292, %v290
          %v311 = vpack.c.bf16 %v293, %v291
          %v312 = vpack.c.bf16 %v296, %v294
          %v313 = vpack.c.bf16 %v297, %v295
          %v314 = vld [vmem:[%s1] sm:$0xf]
          %v315 = vld [vmem:[%s1 + $0x4] sm:$0xf]
          %v316 = vld [vmem:[%s1 + $0x8] sm:$0xf]
          %v317 = vld [vmem:[%s1 + $0xc] sm:$0xf]
          %v318 = vld [vmem:[%s1 + $0x10] sm:$0xf]
          %v319 = vld [vmem:[%s1 + $0x14] sm:$0xf]
          %v320 = vld [vmem:[%s1 + $0x18] sm:$0xf]
          %v321 = vld [vmem:[%s1 + $0x1c] sm:$0xf]
          %v322 = vld [vmem:[%s1 + $0x20] sm:$0xf]
          %v323 = vld [vmem:[%s1 + $0x24] sm:$0xf]
          %v324 = vld [vmem:[%s1 + $0x28] sm:$0xf]
          %v325 = vld [vmem:[%s1 + $0x2c] sm:$0xf]
          %v326 = vld [vmem:[%s1 + $0x30] sm:$0xf]
          %v327 = vld [vmem:[%s1 + $0x34] sm:$0xf]
          %v328 = vld [vmem:[%s1 + $0x38] sm:$0xf]
          %v329 = vld [vmem:[%s1 + $0x3c] sm:$0xf]
          %v330 = vld [vmem:[%s3] sm:$0xff]
          %v331 = vld [vmem:[%s3 + $0x8] sm:$0xff]
          %v332 = vld [vmem:[%s3 + $0x10] sm:$0xff]
          %v333 = vld [vmem:[%s3 + $0x18] sm:$0xff]
          %v334 = vld [vmem:[%s3 + $0x20] sm:$0xff]
          %v335 = vld [vmem:[%s3 + $0x28] sm:$0xff]
          %v336 = vld [vmem:[%s3 + $0x30] sm:$0xff]
          %v337 = vld [vmem:[%s3 + $0x38] sm:$0xff]
          %v338 = vld [vmem:[%s3 + $0x40] sm:$0xff]
          %v339 = vld [vmem:[%s3 + $0x48] sm:$0xff]
          %v340 = vld [vmem:[%s3 + $0x50] sm:$0xff]
          %v341 = vld [vmem:[%s3 + $0x58] sm:$0xff]
          %v342 = vld [vmem:[%s3 + $0x60] sm:$0xff]
          %v343 = vld [vmem:[%s3 + $0x68] sm:$0xff]
          %v344 = vld [vmem:[%s3 + $0x70] sm:$0xff]
          %v345 = vld [vmem:[%s3 + $0x78] sm:$0xff]
          %347 = vset.pattern.permute.xlu0 0
          %348 = vperm.xlu0 %347, %v330
          %v349 = vpop.permute.xlu0 %348
          %352 = vset.pattern.permute.xlu0 0
          %353 = vperm.xlu0 %352, %v331
          %v354 = vpop.permute.xlu0 %353
          %357 = vset.pattern.permute.xlu0 0
          %358 = vperm.xlu0 %357, %v332
          %v359 = vpop.permute.xlu0 %358
          %362 = vset.pattern.permute.xlu0 0
          %363 = vperm.xlu0 %362, %v333
          %v364 = vpop.permute.xlu0 %363
          %367 = vset.pattern.permute.xlu0 0
          %368 = vperm.xlu0 %367, %v334
          %v369 = vpop.permute.xlu0 %368
          %372 = vset.pattern.permute.xlu0 0
          %373 = vperm.xlu0 %372, %v335
          %v374 = vpop.permute.xlu0 %373
          %377 = vset.pattern.permute.xlu0 0
          %378 = vperm.xlu0 %377, %v336
          %v379 = vpop.permute.xlu0 %378
          %382 = vset.pattern.permute.xlu0 0
          %383 = vperm.xlu0 %382, %v337
          %v384 = vpop.permute.xlu0 %383
          %387 = vset.pattern.permute.xlu0 0
          %388 = vperm.xlu0 %387, %v338
          %v389 = vpop.permute.xlu0 %388
          %392 = vset.pattern.permute.xlu0 0
          %393 = vperm.xlu0 %392, %v339
          %v394 = vpop.permute.xlu0 %393
          %397 = vset.pattern.permute.xlu0 0
          %398 = vperm.xlu0 %397, %v340
          %v399 = vpop.permute.xlu0 %398
          %402 = vset.pattern.permute.xlu0 0
          %403 = vperm.xlu0 %402, %v341
          %v404 = vpop.permute.xlu0 %403
          %407 = vset.pattern.permute.xlu0 0
          %408 = vperm.xlu0 %407, %v342
          %v409 = vpop.permute.xlu0 %408
          %412 = vset.pattern.permute.xlu0 0
          %413 = vperm.xlu0 %412, %v343
          %v414 = vpop.permute.xlu0 %413
          %417 = vset.pattern.permute.xlu0 0
          %418 = vperm.xlu0 %417, %v344
          %v419 = vpop.permute.xlu0 %418
          %422 = vset.pattern.permute.xlu0 0
          %423 = vperm.xlu0 %422, %v345
          %v424 = vpop.permute.xlu0 %423
          %v442 = vunpack.c.l.b16 %v314
          %v443 = vunpack.c.l.b16 %v315
          %v444 = vunpack.c.l.b16 %v316
          %v445 = vunpack.c.l.b16 %v317
          %v446 = vunpack.c.l.b16 %v318
          %v447 = vunpack.c.l.b16 %v319
          %v448 = vunpack.c.l.b16 %v320
          %v449 = vunpack.c.l.b16 %v321
          %v450 = vunpack.c.l.b16 %v322
          %v451 = vunpack.c.l.b16 %v323
          %v452 = vunpack.c.l.b16 %v324
          %v453 = vunpack.c.l.b16 %v325
          %v454 = vunpack.c.l.b16 %v326
          %v455 = vunpack.c.l.b16 %v327
          %v456 = vunpack.c.l.b16 %v328
          %v457 = vunpack.c.l.b16 %v329
          %v458 = vpack.c.b16 %v443, %v442
          %v459 = vpack.c.b16 %v445, %v444
          %v460 = vpack.c.b16 %v447, %v446
          %v461 = vpack.c.b16 %v449, %v448
          %v462 = vpack.c.b16 %v451, %v450
          %v463 = vpack.c.b16 %v453, %v452
          %v464 = vpack.c.b16 %v455, %v454
          %v465 = vpack.c.b16 %v457, %v456
          %474 = vmatprep.subr.bf16.mxu0 %v313
          %475 = vmatpush1.bf16.msra.mxu0 %v312
          %476 = vmatprep.subr.bf16.mxu0 %v311
          %477 = vmatpush1.bf16.msra.mxu0 %v310
          %478 = vmatprep.subr.bf16.mxu0 %v309
          %479 = vmatpush1.bf16.msra.mxu0 %v308
          %480 = vmatprep.subr.bf16.mxu0 %v307
          %481 = vmatpush1.bf16.msra.mxu0 %v306
          %482 = vmatprep.subr.bf16.mxu0 %v305
          %483 = vmatpush1.bf16.msra.mxu0 %v304
          %484 = vmatprep.subr.bf16.mxu0 %v303
          %485 = vmatpush1.bf16.msra.mxu0 %v302
          %486 = vmatprep.subr.bf16.mxu0 %v301
          %487 = vmatpush1.bf16.msra.mxu0 %v300
          %488 = vmatprep.subr.bf16.mxu0 %v299
          %489 = vmatpush1.bf16.msra.mxu0 %v298
          %490 = vmatprep.subr.bf16.mxu0 0
          %491 = vmatpush2.bf16.msra.mxu0 0
          %492 = vmatprep.subr.bf16.mxu0 0
          %493 = vmatpush2.bf16.msra.mxu0 0
          %494 = vmatprep.subr.bf16.mxu0 0
          %495 = vmatpush2.bf16.msra.mxu0 0
          %496 = vmatprep.subr.bf16.mxu0 0
          %497 = vmatpush2.bf16.msra.mxu0 0
          %498 = vmatprep.subr.bf16.mxu0 0
          %499 = vmatpush2.bf16.msra.mxu0 0
          %500 = vmatprep.subr.bf16.mxu0 0
          %501 = vmatpush2.bf16.msra.mxu0 0
          %502 = vmatprep.subr.bf16.mxu0 0
          %503 = vmatpush2.bf16.msra.mxu0 0
          %504 = vmatprep.subr.bf16.mxu0 0
          %505 = vmatpush2.bf16.msra.mxu0 0
          %506 = vmatprep.mubr.bf16.mxu0 0
          %507 = vmatmul.mubr.bf16.gmra.mxu0 %v458
          %v508 = vpop.f32.mrf.mxu0
          %v509 = vadd.f32 %v349, %v508
          %v510 = vpop.f32.mrf.mxu0
          %v511 = vadd.f32 %v349, %v510
          %v512 = vpop.f32.mrf.mxu0
          %v513 = vadd.f32 %v354, %v512
          %v514 = vpop.f32.mrf.mxu0
          %v515 = vadd.f32 %v354, %v514
          %516 = vmatprep.mubr.bf16.mxu0 0
          %517 = vmatmul.mubr.bf16.gmra.mxu0 %v459
          %v518 = vpop.f32.mrf.mxu0
          %v519 = vadd.f32 %v359, %v518
          %v520 = vpop.f32.mrf.mxu0
          %v521 = vadd.f32 %v359, %v520
          %v522 = vpop.f32.mrf.mxu0
          %v523 = vadd.f32 %v364, %v522
          %v524 = vpop.f32.mrf.mxu0
          %v525 = vadd.f32 %v364, %v524
          %526 = vmatprep.mubr.bf16.mxu0 0
          %527 = vmatmul.mubr.bf16.gmra.mxu0 %v460
          %v528 = vpop.f32.mrf.mxu0
          %v529 = vadd.f32 %v369, %v528
          %v530 = vpop.f32.mrf.mxu0
          %v531 = vadd.f32 %v369, %v530
          %v532 = vpop.f32.mrf.mxu0
          %v533 = vadd.f32 %v374, %v532
          %v534 = vpop.f32.mrf.mxu0
          %v535 = vadd.f32 %v374, %v534
          %536 = vmatprep.mubr.bf16.mxu0 0
          %537 = vmatmul.mubr.bf16.gmra.mxu0 %v461
          %v538 = vpop.f32.mrf.mxu0
          %v539 = vadd.f32 %v379, %v538
          %v540 = vpop.f32.mrf.mxu0
          %v541 = vadd.f32 %v379, %v540
          %v542 = vpop.f32.mrf.mxu0
          %v543 = vadd.f32 %v384, %v542
          %v544 = vpop.f32.mrf.mxu0
          %v545 = vadd.f32 %v384, %v544
          %546 = vmatprep.mubr.bf16.mxu0 0
          %547 = vmatmul.mubr.bf16.gmra.mxu0 %v462
          %v548 = vpop.f32.mrf.mxu0
          %v549 = vadd.f32 %v389, %v548
          %v550 = vpop.f32.mrf.mxu0
          %v551 = vadd.f32 %v389, %v550
          %v552 = vpop.f32.mrf.mxu0
          %v553 = vadd.f32 %v394, %v552
          %v554 = vpop.f32.mrf.mxu0
          %v555 = vadd.f32 %v394, %v554
          %556 = vmatprep.mubr.bf16.mxu0 0
          %557 = vmatmul.mubr.bf16.gmra.mxu0 %v463
          %v558 = vpop.f32.mrf.mxu0
          %v559 = vadd.f32 %v399, %v558
          %v560 = vpop.f32.mrf.mxu0
          %v561 = vadd.f32 %v399, %v560
          %v562 = vpop.f32.mrf.mxu0
          %v563 = vadd.f32 %v404, %v562
          %v564 = vpop.f32.mrf.mxu0
          %v565 = vadd.f32 %v404, %v564
          %566 = vmatprep.mubr.bf16.mxu0 0
          %567 = vmatmul.mubr.bf16.gmra.mxu0 %v464
          %v568 = vpop.f32.mrf.mxu0
          %v569 = vadd.f32 %v409, %v568
          %v570 = vpop.f32.mrf.mxu0
          %v571 = vadd.f32 %v409, %v570
          %v572 = vpop.f32.mrf.mxu0
          %v573 = vadd.f32 %v414, %v572
          %v574 = vpop.f32.mrf.mxu0
          %v575 = vadd.f32 %v414, %v574
          %576 = vmatprep.mubr.bf16.mxu0 0
          %577 = vmatmul.mubr.bf16.gmra.mxu0 %v465
          %v578 = vpop.f32.mrf.mxu0
          %v579 = vadd.f32 %v419, %v578
          %v580 = vpop.f32.mrf.mxu0
          %v581 = vadd.f32 %v419, %v580
          %v582 = vpop.f32.mrf.mxu0
          %v583 = vadd.f32 %v424, %v582
          %v584 = vpop.f32.mrf.mxu0
          %v585 = vadd.f32 %v424, %v584
          %586 = vdwg.mxu0
          %v587 = vpack.c.bf16 %v513, %v509
          %v588 = vpack.c.bf16 %v515, %v511
          %v589 = vpack.c.bf16 %v523, %v519
          %v590 = vpack.c.bf16 %v525, %v521
          %v591 = vpack.c.bf16 %v533, %v529
          %v592 = vpack.c.bf16 %v535, %v531
          %v593 = vpack.c.bf16 %v543, %v539
          %v594 = vpack.c.bf16 %v545, %v541
          %v595 = vpack.c.bf16 %v553, %v549
          %v596 = vpack.c.bf16 %v555, %v551
          %v597 = vpack.c.bf16 %v563, %v559
          %v598 = vpack.c.bf16 %v565, %v561
          %v599 = vpack.c.bf16 %v573, %v569
          %v600 = vpack.c.bf16 %v575, %v571
          %v601 = vpack.c.bf16 %v583, %v579
          %v602 = vpack.c.bf16 %v585, %v581
          %v619 = vunpack.c.l.b16 %v587
          %v620 = vunpack.c.l.b16 %v588
          %v621 = vunpack.c.h.b16 %v587
          %v622 = vunpack.c.h.b16 %v588
          %v623 = vunpack.c.l.b16 %v589
          %v624 = vunpack.c.l.b16 %v590
          %v625 = vunpack.c.h.b16 %v589
          %v626 = vunpack.c.h.b16 %v590
          %v627 = vunpack.c.l.b16 %v591
          %v628 = vunpack.c.l.b16 %v592
          %v629 = vunpack.c.h.b16 %v591
          %v630 = vunpack.c.h.b16 %v592
          %v631 = vunpack.c.l.b16 %v593
          %v632 = vunpack.c.l.b16 %v594
          %v633 = vunpack.c.h.b16 %v593
          %v634 = vunpack.c.h.b16 %v594
          %v635 = vunpack.c.l.b16 %v595
          %v636 = vunpack.c.l.b16 %v596
          %v637 = vunpack.c.h.b16 %v595
          %v638 = vunpack.c.h.b16 %v596
          %v639 = vunpack.c.l.b16 %v597
          %v640 = vunpack.c.l.b16 %v598
          %v641 = vunpack.c.h.b16 %v597
          %v642 = vunpack.c.h.b16 %v598
          %v643 = vunpack.c.l.b16 %v599
          %v644 = vunpack.c.l.b16 %v600
          %v645 = vunpack.c.h.b16 %v599
          %v646 = vunpack.c.h.b16 %v600
          %v647 = vunpack.c.l.b16 %v601
          %v648 = vunpack.c.l.b16 %v602
          %v649 = vunpack.c.h.b16 %v601
          %v650 = vunpack.c.h.b16 %v602
          %v651 = vpack.c.b16 %v620, %v619
          %v652 = vpack.c.b16 %v622, %v621
          %v653 = vpack.c.b16 %v624, %v623
          %v654 = vpack.c.b16 %v626, %v625
          %v655 = vpack.c.b16 %v628, %v627
          %v656 = vpack.c.b16 %v630, %v629
          %v657 = vpack.c.b16 %v632, %v631
          %v658 = vpack.c.b16 %v634, %v633
          %v659 = vpack.c.b16 %v636, %v635
          %v660 = vpack.c.b16 %v638, %v637
          %v661 = vpack.c.b16 %v640, %v639
          %v662 = vpack.c.b16 %v642, %v641
          %v663 = vpack.c.b16 %v644, %v643
          %v664 = vpack.c.b16 %v646, %v645
          %v665 = vpack.c.b16 %v648, %v647
          %v666 = vpack.c.b16 %v650, %v649
          %683 = vst [vmem:[#allocation2] sm:$0xff] %v651
          %684 = vst [vmem:[#allocation2 + $0x8] sm:$0xff] %v652
          %685 = vst [vmem:[#allocation2 + $0x10] sm:$0xff] %v653
          %686 = vst [vmem:[#allocation2 + $0x18] sm:$0xff] %v654
          %687 = vst [vmem:[#allocation2 + $0x20] sm:$0xff] %v655
          %688 = vst [vmem:[#allocation2 + $0x28] sm:$0xff] %v656
          %689 = vst [vmem:[#allocation2 + $0x30] sm:$0xff] %v657
          %690 = vst [vmem:[#allocation2 + $0x38] sm:$0xff] %v658
          %691 = vst [vmem:[#allocation2 + $0x40] sm:$0xff] %v659
          %692 = vst [vmem:[#allocation2 + $0x48] sm:$0xff] %v660
          %693 = vst [vmem:[#allocation2 + $0x50] sm:$0xff] %v661
          %694 = vst [vmem:[#allocation2 + $0x58] sm:$0xff] %v662
          %695 = vst [vmem:[#allocation2 + $0x60] sm:$0xff] %v663
          %696 = vst [vmem:[#allocation2 + $0x68] sm:$0xff] %v664
          %697 = vst [vmem:[#allocation2 + $0x70] sm:$0xff] %v665
          %698 = vst [vmem:[#allocation2 + $0x78] sm:$0xff] %v666
          %699 = vxpose.xlu0.b32.start [1/16] %v266, 128
          %700 = vxpose.xlu0.b32.cont [2/16] %v268, 128
          %701 = vxpose.xlu0.b32.cont [3/16] %v270, 128
          %702 = vxpose.xlu0.b32.cont [4/16] %v272, 128
          %703 = vxpose.xlu0.b32.cont [5/16] %v274, 128
          %704 = vxpose.xlu0.b32.cont [6/16] %v276, 128
          %705 = vxpose.xlu0.b32.cont [7/16] %v278, 128
          %706 = vxpose.xlu0.b32.cont [8/16] %v280, 128
          %707 = vxpose.xlu0.b32.cont [9/16] %v282, 128
          %708 = vxpose.xlu0.b32.cont [10/16] %v284, 128
          %709 = vxpose.xlu0.b32.cont [11/16] %v286, 128
          %710 = vxpose.xlu0.b32.cont [12/16] %v288, 128
          %711 = vxpose.xlu0.b32.cont [13/16] %v290, 128
          %712 = vxpose.xlu0.b32.cont [14/16] %v292, 128
          %713 = vxpose.xlu0.b32.cont [15/16] %v294, 128
          %714 = vxpose.xlu0.b32.end [16/16] %v296, 128
          %v715 = vpop.trf.xlu0
          %v716 = vpop.trf.xlu0
          %v717 = vpop.trf.xlu0
          %v718 = vpop.trf.xlu0
          %v719 = vpop.trf.xlu0
          %v720 = vpop.trf.xlu0
          %v721 = vpop.trf.xlu0
          %v722 = vpop.trf.xlu0
          %v723 = vpop.trf.xlu0
          %v724 = vpop.trf.xlu0
          %v725 = vpop.trf.xlu0
          %v726 = vpop.trf.xlu0
          %v727 = vpop.trf.xlu0
          %v728 = vpop.trf.xlu0
          %v729 = vpop.trf.xlu0
          %v730 = vpop.trf.xlu0
          %731 = vxpose.xlu0.b32.start [1/16] %v267, 128
          %732 = vxpose.xlu0.b32.cont [2/16] %v269, 128
          %733 = vxpose.xlu0.b32.cont [3/16] %v271, 128
          %734 = vxpose.xlu0.b32.cont [4/16] %v273, 128
          %735 = vxpose.xlu0.b32.cont [5/16] %v275, 128
          %736 = vxpose.xlu0.b32.cont [6/16] %v277, 128
          %737 = vxpose.xlu0.b32.cont [7/16] %v279, 128
          %738 = vxpose.xlu0.b32.cont [8/16] %v281, 128
          %739 = vxpose.xlu0.b32.cont [9/16] %v283, 128
          %740 = vxpose.xlu0.b32.cont [10/16] %v285, 128
          %741 = vxpose.xlu0.b32.cont [11/16] %v287, 128
          %742 = vxpose.xlu0.b32.cont [12/16] %v289, 128
          %743 = vxpose.xlu0.b32.cont [13/16] %v291, 128
          %744 = vxpose.xlu0.b32.cont [14/16] %v293, 128
          %745 = vxpose.xlu0.b32.cont [15/16] %v295, 128
          %746 = vxpose.xlu0.b32.end [16/16] %v297, 128
          %v747 = vpop.trf.xlu0
          %v748 = vpop.trf.xlu0
          %v749 = vpop.trf.xlu0
          %v750 = vpop.trf.xlu0
          %v751 = vpop.trf.xlu0
          %v752 = vpop.trf.xlu0
          %v753 = vpop.trf.xlu0
          %v754 = vpop.trf.xlu0
          %v755 = vpop.trf.xlu0
          %v756 = vpop.trf.xlu0
          %v757 = vpop.trf.xlu0
          %v758 = vpop.trf.xlu0
          %v759 = vpop.trf.xlu0
          %v760 = vpop.trf.xlu0
          %v761 = vpop.trf.xlu0
          %v762 = vpop.trf.xlu0
          %v763 = vpack.c.bf16 %v716, %v715
          %v764 = vpack.c.bf16 %v718, %v717
          %v765 = vpack.c.bf16 %v720, %v719
          %v766 = vpack.c.bf16 %v722, %v721
          %v767 = vpack.c.bf16 %v724, %v723
          %v768 = vpack.c.bf16 %v726, %v725
          %v769 = vpack.c.bf16 %v728, %v727
          %v770 = vpack.c.bf16 %v730, %v729
          %v771 = vpack.c.bf16 %v748, %v747
          %v772 = vpack.c.bf16 %v750, %v749
          %v773 = vpack.c.bf16 %v752, %v751
          %v774 = vpack.c.bf16 %v754, %v753
          %v775 = vpack.c.bf16 %v756, %v755
          %v776 = vpack.c.bf16 %v758, %v757
          %v777 = vpack.c.bf16 %v760, %v759
          %v778 = vpack.c.bf16 %v762, %v761
          %v779 = vld [vmem:[%s2] sm:$0xf]
          %v780 = vld [vmem:[%s2 + $0x4] sm:$0xf]
          %v781 = vld [vmem:[%s2 + $0x8] sm:$0xf]
          %v782 = vld [vmem:[%s2 + $0xc] sm:$0xf]
          %v783 = vld [vmem:[%s2 + $0x10] sm:$0xf]
          %v784 = vld [vmem:[%s2 + $0x14] sm:$0xf]
          %v785 = vld [vmem:[%s2 + $0x18] sm:$0xf]
          %v786 = vld [vmem:[%s2 + $0x1c] sm:$0xf]
          %v787 = vld [vmem:[%s2 + $0x20] sm:$0xf]
          %v788 = vld [vmem:[%s2 + $0x24] sm:$0xf]
          %v789 = vld [vmem:[%s2 + $0x28] sm:$0xf]
          %v790 = vld [vmem:[%s2 + $0x2c] sm:$0xf]
          %v791 = vld [vmem:[%s2 + $0x30] sm:$0xf]
          %v792 = vld [vmem:[%s2 + $0x34] sm:$0xf]
          %v793 = vld [vmem:[%s2 + $0x38] sm:$0xf]
          %v794 = vld [vmem:[%s2 + $0x3c] sm:$0xf]
          %v795 = vld [vmem:[%s4] sm:$0x1]
          %v797 = vlaneseq
          %v798 = vshrl.u32 %v797, 7
          %v799 = vsub.s32 0, %v798
          %v800 = vrot.slane %v795, %v799
          %v818 = vunpack.c.l.b16 %v779
          %v819 = vunpack.c.l.b16 %v780
          %v820 = vunpack.c.l.b16 %v781
          %v821 = vunpack.c.l.b16 %v782
          %v822 = vunpack.c.l.b16 %v783
          %v823 = vunpack.c.l.b16 %v784
          %v824 = vunpack.c.l.b16 %v785
          %v825 = vunpack.c.l.b16 %v786
          %v826 = vunpack.c.l.b16 %v787
          %v827 = vunpack.c.l.b16 %v788
          %v828 = vunpack.c.l.b16 %v789
          %v829 = vunpack.c.l.b16 %v790
          %v830 = vunpack.c.l.b16 %v791
          %v831 = vunpack.c.l.b16 %v792
          %v832 = vunpack.c.l.b16 %v793
          %v833 = vunpack.c.l.b16 %v794
          %v834 = vpack.c.b16 %v819, %v818
          %v835 = vpack.c.b16 %v821, %v820
          %v836 = vpack.c.b16 %v823, %v822
          %v837 = vpack.c.b16 %v825, %v824
          %v838 = vpack.c.b16 %v827, %v826
          %v839 = vpack.c.b16 %v829, %v828
          %v840 = vpack.c.b16 %v831, %v830
          %v841 = vpack.c.b16 %v833, %v832
          %850 = vmatprep.subr.bf16.mxu0 0
          %851 = vmatpush1.bf16.msra.mxu0 %v841
          %852 = vmatprep.subr.bf16.mxu0 0
          %853 = vmatpush1.bf16.msra.mxu0 %v840
          %854 = vmatprep.subr.bf16.mxu0 0
          %855 = vmatpush1.bf16.msra.mxu0 %v839
          %856 = vmatprep.subr.bf16.mxu0 0
          %857 = vmatpush1.bf16.msra.mxu0 %v838
          %858 = vmatprep.subr.bf16.mxu0 0
          %859 = vmatpush1.bf16.msra.mxu0 %v837
          %860 = vmatprep.subr.bf16.mxu0 0
          %861 = vmatpush1.bf16.msra.mxu0 %v836
          %862 = vmatprep.subr.bf16.mxu0 0
          %863 = vmatpush1.bf16.msra.mxu0 %v835
          %864 = vmatprep.subr.bf16.mxu0 0
          %865 = vmatpush1.bf16.msra.mxu0 %v834
          %866 = vmatprep.subr.bf16.mxu0 0
          %867 = vmatpush2.bf16.msra.mxu0 0
          %868 = vmatprep.subr.bf16.mxu0 0
          %869 = vmatpush2.bf16.msra.mxu0 0
          %870 = vmatprep.subr.bf16.mxu0 0
          %871 = vmatpush2.bf16.msra.mxu0 0
          %872 = vmatprep.subr.bf16.mxu0 0
          %873 = vmatpush2.bf16.msra.mxu0 0
          %874 = vmatprep.subr.bf16.mxu0 0
          %875 = vmatpush2.bf16.msra.mxu0 0
          %876 = vmatprep.subr.bf16.mxu0 0
          %877 = vmatpush2.bf16.msra.mxu0 0
          %878 = vmatprep.subr.bf16.mxu0 0
          %879 = vmatpush2.bf16.msra.mxu0 0
          %880 = vmatprep.subr.bf16.mxu0 0
          %881 = vmatpush2.bf16.msra.mxu0 0
          %882 = vmatprep.mubr.bf16.mxu0 0
          %883 = vmatmul.mubr.bf16.gmra.mxu0 %v763
          %v884 = vpop.f32.mrf.mxu0
          %v885 = vadd.f32 %v800, %v884
          %v886 = vpop.f32.mrf.mxu0
          %v887 = vpop.f32.mrf.mxu0
          %v888 = vadd.f32 %v800, %v887
          %v889 = vpop.f32.mrf.mxu0
          %890 = vmatprep.mubr.bf16.mxu0 0
          %891 = vmatmul.mubr.bf16.gmra.mxu0 %v764
          %v892 = vpop.f32.mrf.mxu0
          %v893 = vadd.f32 %v800, %v892
          %v894 = vpop.f32.mrf.mxu0
          %v895 = vpop.f32.mrf.mxu0
          %v896 = vadd.f32 %v800, %v895
          %v897 = vpop.f32.mrf.mxu0
          %898 = vmatprep.mubr.bf16.mxu0 0
          %899 = vmatmul.mubr.bf16.gmra.mxu0 %v765
          %v900 = vpop.f32.mrf.mxu0
          %v901 = vadd.f32 %v800, %v900
          %v902 = vpop.f32.mrf.mxu0
          %v903 = vpop.f32.mrf.mxu0
          %v904 = vadd.f32 %v800, %v903
          %v905 = vpop.f32.mrf.mxu0
          %906 = vmatprep.mubr.bf16.mxu0 0
          %907 = vmatmul.mubr.bf16.gmra.mxu0 %v766
          %v908 = vpop.f32.mrf.mxu0
          %v909 = vadd.f32 %v800, %v908
          %v910 = vpop.f32.mrf.mxu0
          %v911 = vpop.f32.mrf.mxu0
          %v912 = vadd.f32 %v800, %v911
          %v913 = vpop.f32.mrf.mxu0
          %914 = vmatprep.mubr.bf16.mxu0 0
          %915 = vmatmul.mubr.bf16.gmra.mxu0 %v767
          %v916 = vpop.f32.mrf.mxu0
          %v917 = vadd.f32 %v800, %v916
          %v918 = vpop.f32.mrf.mxu0
          %v919 = vpop.f32.mrf.mxu0
          %v920 = vadd.f32 %v800, %v919
          %v921 = vpop.f32.mrf.mxu0
          %922 = vmatprep.mubr.bf16.mxu0 0
          %923 = vmatmul.mubr.bf16.gmra.mxu0 %v768
          %v924 = vpop.f32.mrf.mxu0
          %v925 = vadd.f32 %v800, %v924
          %v926 = vpop.f32.mrf.mxu0
          %v927 = vpop.f32.mrf.mxu0
          %v928 = vadd.f32 %v800, %v927
          %v929 = vpop.f32.mrf.mxu0
          %930 = vmatprep.mubr.bf16.mxu0 0
          %931 = vmatmul.mubr.bf16.gmra.mxu0 %v769
          %v932 = vpop.f32.mrf.mxu0
          %v933 = vadd.f32 %v800, %v932
          %v934 = vpop.f32.mrf.mxu0
          %v935 = vpop.f32.mrf.mxu0
          %v936 = vadd.f32 %v800, %v935
          %v937 = vpop.f32.mrf.mxu0
          %938 = vmatprep.mubr.bf16.mxu0 0
          %939 = vmatmul.mubr.bf16.gmra.mxu0 %v770
          %v940 = vpop.f32.mrf.mxu0
          %v941 = vadd.f32 %v800, %v940
          %v942 = vpop.f32.mrf.mxu0
          %v943 = vpop.f32.mrf.mxu0
          %v944 = vadd.f32 %v800, %v943
          %v945 = vpop.f32.mrf.mxu0
          %946 = vmatprep.mubr.bf16.mxu0 0
          %947 = vmatmul.mubr.bf16.gmra.mxu0 %v771
          %v948 = vpop.f32.mrf.mxu0
          %v949 = vadd.f32 %v800, %v948
          %v950 = vpop.f32.mrf.mxu0
          %v951 = vpop.f32.mrf.mxu0
          %v952 = vadd.f32 %v800, %v951
          %v953 = vpop.f32.mrf.mxu0
          %954 = vmatprep.mubr.bf16.mxu0 0
          %955 = vmatmul.mubr.bf16.gmra.mxu0 %v772
          %v956 = vpop.f32.mrf.mxu0
          %v957 = vadd.f32 %v800, %v956
          %v958 = vpop.f32.mrf.mxu0
          %v959 = vpop.f32.mrf.mxu0
          %v960 = vadd.f32 %v800, %v959
          %v961 = vpop.f32.mrf.mxu0
          %962 = vmatprep.mubr.bf16.mxu0 0
          %963 = vmatmul.mubr.bf16.gmra.mxu0 %v773
          %v964 = vpop.f32.mrf.mxu0
          %v965 = vadd.f32 %v800, %v964
          %v966 = vpop.f32.mrf.mxu0
          %v967 = vpop.f32.mrf.mxu0
          %v968 = vadd.f32 %v800, %v967
          %v969 = vpop.f32.mrf.mxu0
          %970 = vmatprep.mubr.bf16.mxu0 0
          %971 = vmatmul.mubr.bf16.gmra.mxu0 %v774
          %v972 = vpop.f32.mrf.mxu0
          %v973 = vadd.f32 %v800, %v972
          %v974 = vpop.f32.mrf.mxu0
          %v975 = vpop.f32.mrf.mxu0
          %v976 = vadd.f32 %v800, %v975
          %v977 = vpop.f32.mrf.mxu0
          %978 = vmatprep.mubr.bf16.mxu0 0
          %979 = vmatmul.mubr.bf16.gmra.mxu0 %v775
          %v980 = vpop.f32.mrf.mxu0
          %v981 = vadd.f32 %v800, %v980
          %v982 = vpop.f32.mrf.mxu0
          %v983 = vpop.f32.mrf.mxu0
          %v984 = vadd.f32 %v800, %v983
          %v985 = vpop.f32.mrf.mxu0
          %986 = vmatprep.mubr.bf16.mxu0 0
          %987 = vmatmul.mubr.bf16.gmra.mxu0 %v776
          %v988 = vpop.f32.mrf.mxu0
          %v989 = vadd.f32 %v800, %v988
          %v990 = vpop.f32.mrf.mxu0
          %v991 = vpop.f32.mrf.mxu0
          %v992 = vadd.f32 %v800, %v991
          %v993 = vpop.f32.mrf.mxu0
          %994 = vmatprep.mubr.bf16.mxu0 0
          %995 = vmatmul.mubr.bf16.gmra.mxu0 %v777
          %v996 = vpop.f32.mrf.mxu0
          %v997 = vadd.f32 %v800, %v996
          %v998 = vpop.f32.mrf.mxu0
          %v999 = vpop.f32.mrf.mxu0
          %v1000 = vadd.f32 %v800, %v999
          %v1001 = vpop.f32.mrf.mxu0
          %1002 = vmatprep.mubr.bf16.mxu0 0
          %1003 = vmatmul.mubr.bf16.gmra.mxu0 %v778
          %v1004 = vpop.f32.mrf.mxu0
          %v1005 = vadd.f32 %v800, %v1004
          %v1006 = vpop.f32.mrf.mxu0
          %v1007 = vpop.f32.mrf.mxu0
          %v1008 = vadd.f32 %v800, %v1007
          %v1009 = vpop.f32.mrf.mxu0
          %1010 = vdwg.mxu0
          %v1011 = vpack.c.bf16 %v888, %v885
          %v1012 = vpack.c.bf16 %v896, %v893
          %v1013 = vpack.c.bf16 %v904, %v901
          %v1014 = vpack.c.bf16 %v912, %v909
          %v1015 = vpack.c.bf16 %v920, %v917
          %v1016 = vpack.c.bf16 %v928, %v925
          %v1017 = vpack.c.bf16 %v936, %v933
          %v1018 = vpack.c.bf16 %v944, %v941
          %v1019 = vpack.c.bf16 %v952, %v949
          %v1020 = vpack.c.bf16 %v960, %v957
          %v1021 = vpack.c.bf16 %v968, %v965
          %v1022 = vpack.c.bf16 %v976, %v973
          %v1023 = vpack.c.bf16 %v984, %v981
          %v1024 = vpack.c.bf16 %v992, %v989
          %v1025 = vpack.c.bf16 %v1000, %v997
          %v1026 = vpack.c.bf16 %v1008, %v1005
          %v1043 = vunpack.c.l.b16 %v1011
          %v1044 = vunpack.c.h.b16 %v1011
          %v1045 = vunpack.c.l.b16 %v1012
          %v1046 = vunpack.c.h.b16 %v1012
          %v1047 = vunpack.c.l.b16 %v1013
          %v1048 = vunpack.c.h.b16 %v1013
          %v1049 = vunpack.c.l.b16 %v1014
          %v1050 = vunpack.c.h.b16 %v1014
          %v1051 = vunpack.c.l.b16 %v1015
          %v1052 = vunpack.c.h.b16 %v1015
          %v1053 = vunpack.c.l.b16 %v1016
          %v1054 = vunpack.c.h.b16 %v1016
          %v1055 = vunpack.c.l.b16 %v1017
          %v1056 = vunpack.c.h.b16 %v1017
          %v1057 = vunpack.c.l.b16 %v1018
          %v1058 = vunpack.c.h.b16 %v1018
          %v1059 = vunpack.c.l.b16 %v1019
          %v1060 = vunpack.c.h.b16 %v1019
          %v1061 = vunpack.c.l.b16 %v1020
          %v1062 = vunpack.c.h.b16 %v1020
          %v1063 = vunpack.c.l.b16 %v1021
          %v1064 = vunpack.c.h.b16 %v1021
          %v1065 = vunpack.c.l.b16 %v1022
          %v1066 = vunpack.c.h.b16 %v1022
          %v1067 = vunpack.c.l.b16 %v1023
          %v1068 = vunpack.c.h.b16 %v1023
          %v1069 = vunpack.c.l.b16 %v1024
          %v1070 = vunpack.c.h.b16 %v1024
          %v1071 = vunpack.c.l.b16 %v1025
          %v1072 = vunpack.c.h.b16 %v1025
          %v1073 = vunpack.c.l.b16 %v1026
          %v1074 = vunpack.c.h.b16 %v1026
          %v1075 = vpack.c.b16 %v1043, %v1043
          %v1076 = vpack.c.b16 %v1044, %v1044
          %v1077 = vpack.c.b16 %v1045, %v1045
          %v1078 = vpack.c.b16 %v1046, %v1046
          %v1079 = vpack.c.b16 %v1047, %v1047
          %v1080 = vpack.c.b16 %v1048, %v1048
          %v1081 = vpack.c.b16 %v1049, %v1049
          %v1082 = vpack.c.b16 %v1050, %v1050
          %v1083 = vpack.c.b16 %v1051, %v1051
          %v1084 = vpack.c.b16 %v1052, %v1052
          %v1085 = vpack.c.b16 %v1053, %v1053
          %v1086 = vpack.c.b16 %v1054, %v1054
          %v1087 = vpack.c.b16 %v1055, %v1055
          %v1088 = vpack.c.b16 %v1056, %v1056
          %v1089 = vpack.c.b16 %v1057, %v1057
          %v1090 = vpack.c.b16 %v1058, %v1058
          %v1091 = vpack.c.b16 %v1059, %v1059
          %v1092 = vpack.c.b16 %v1060, %v1060
          %v1093 = vpack.c.b16 %v1061, %v1061
          %v1094 = vpack.c.b16 %v1062, %v1062
          %v1095 = vpack.c.b16 %v1063, %v1063
          %v1096 = vpack.c.b16 %v1064, %v1064
          %v1097 = vpack.c.b16 %v1065, %v1065
          %v1098 = vpack.c.b16 %v1066, %v1066
          %v1099 = vpack.c.b16 %v1067, %v1067
          %v1100 = vpack.c.b16 %v1068, %v1068
          %v1101 = vpack.c.b16 %v1069, %v1069
          %v1102 = vpack.c.b16 %v1070, %v1070
          %v1103 = vpack.c.b16 %v1071, %v1071
          %v1104 = vpack.c.b16 %v1072, %v1072
          %v1105 = vpack.c.b16 %v1073, %v1073
          %v1106 = vpack.c.b16 %v1074, %v1074
          %vm1139 = vcmask 125952
          %1140 = vst.msk [vmem:[#allocation3] sm:$0xf] %vm1139, %v1075
          %1141 = vst.msk [vmem:[#allocation3 + $0x4] sm:$0xf] %vm1139, %v1076
          %1142 = vst.msk [vmem:[#allocation3 + $0x8] sm:$0xf] %vm1139, %v1077
          %1143 = vst.msk [vmem:[#allocation3 + $0xc] sm:$0xf] %vm1139, %v1078
          %1144 = vst.msk [vmem:[#allocation3 + $0x10] sm:$0xf] %vm1139, %v1079
          %1145 = vst.msk [vmem:[#allocation3 + $0x14] sm:$0xf] %vm1139, %v1080
          %1146 = vst.msk [vmem:[#allocation3 + $0x18] sm:$0xf] %vm1139, %v1081
          %1147 = vst.msk [vmem:[#allocation3 + $0x1c] sm:$0xf] %vm1139, %v1082
          %1148 = vst.msk [vmem:[#allocation3 + $0x20] sm:$0xf] %vm1139, %v1083
          %1149 = vst.msk [vmem:[#allocation3 + $0x24] sm:$0xf] %vm1139, %v1084
          %1150 = vst.msk [vmem:[#allocation3 + $0x28] sm:$0xf] %vm1139, %v1085
          %1151 = vst.msk [vmem:[#allocation3 + $0x2c] sm:$0xf] %vm1139, %v1086
          %1152 = vst.msk [vmem:[#allocation3 + $0x30] sm:$0xf] %vm1139, %v1087
          %1153 = vst.msk [vmem:[#allocation3 + $0x34] sm:$0xf] %vm1139, %v1088
          %1154 = vst.msk [vmem:[#allocation3 + $0x38] sm:$0xf] %vm1139, %v1089
          %1155 = vst.msk [vmem:[#allocation3 + $0x3c] sm:$0xf] %vm1139, %v1090
          %1156 = vst.msk [vmem:[#allocation3 + $0x40] sm:$0xf] %vm1139, %v1091
          %1157 = vst.msk [vmem:[#allocation3 + $0x44] sm:$0xf] %vm1139, %v1092
          %1158 = vst.msk [vmem:[#allocation3 + $0x48] sm:$0xf] %vm1139, %v1093
          %1159 = vst.msk [vmem:[#allocation3 + $0x4c] sm:$0xf] %vm1139, %v1094
          %1160 = vst.msk [vmem:[#allocation3 + $0x50] sm:$0xf] %vm1139, %v1095
          %1161 = vst.msk [vmem:[#allocation3 + $0x54] sm:$0xf] %vm1139, %v1096
          %1162 = vst.msk [vmem:[#allocation3 + $0x58] sm:$0xf] %vm1139, %v1097
          %1163 = vst.msk [vmem:[#allocation3 + $0x5c] sm:$0xf] %vm1139, %v1098
          %1164 = vst.msk [vmem:[#allocation3 + $0x60] sm:$0xf] %vm1139, %v1099
          %1165 = vst.msk [vmem:[#allocation3 + $0x64] sm:$0xf] %vm1139, %v1100
          %1166 = vst.msk [vmem:[#allocation3 + $0x68] sm:$0xf] %vm1139, %v1101
          %1167 = vst.msk [vmem:[#allocation3 + $0x6c] sm:$0xf] %vm1139, %v1102
          %1168 = vst.msk [vmem:[#allocation3 + $0x70] sm:$0xf] %vm1139, %v1103
          %1169 = vst.msk [vmem:[#allocation3 + $0x74] sm:$0xf] %vm1139, %v1104
          %1170 = vst.msk [vmem:[#allocation3 + $0x78] sm:$0xf] %vm1139, %v1105
          %1171 = vst.msk [vmem:[#allocation3 + $0x7c] sm:$0xf] %vm1139, %v1106
          %1172 = vrot.lane.b32.xlu0 %v1075, 112
          %v1173 = vpop.permute.xlu0 %1172
          %1174 = vrot.lane.b32.xlu0 %v1076, 112
          %v1175 = vpop.permute.xlu0 %1174
          %1176 = vrot.lane.b32.xlu0 %v1077, 112
          %v1177 = vpop.permute.xlu0 %1176
          %1178 = vrot.lane.b32.xlu0 %v1078, 112
          %v1179 = vpop.permute.xlu0 %1178
          %1180 = vrot.lane.b32.xlu0 %v1079, 112
          %v1181 = vpop.permute.xlu0 %1180
          %1182 = vrot.lane.b32.xlu0 %v1080, 112
          %v1183 = vpop.permute.xlu0 %1182
          %1184 = vrot.lane.b32.xlu0 %v1081, 112
          %v1185 = vpop.permute.xlu0 %1184
          %1186 = vrot.lane.b32.xlu0 %v1082, 112
          %v1187 = vpop.permute.xlu0 %1186
          %1188 = vrot.lane.b32.xlu0 %v1083, 112
          %v1189 = vpop.permute.xlu0 %1188
          %1190 = vrot.lane.b32.xlu0 %v1084, 112
          %v1191 = vpop.permute.xlu0 %1190
          %1192 = vrot.lane.b32.xlu0 %v1085, 112
          %v1193 = vpop.permute.xlu0 %1192
          %1194 = vrot.lane.b32.xlu0 %v1086, 112
          %v1195 = vpop.permute.xlu0 %1194
          %1196 = vrot.lane.b32.xlu0 %v1087, 112
          %v1197 = vpop.permute.xlu0 %1196
          %1198 = vrot.lane.b32.xlu0 %v1088, 112
          %v1199 = vpop.permute.xlu0 %1198
          %1200 = vrot.lane.b32.xlu0 %v1089, 112
          %v1201 = vpop.permute.xlu0 %1200
          %1202 = vrot.lane.b32.xlu0 %v1090, 112
          %v1203 = vpop.permute.xlu0 %1202
          %1204 = vrot.lane.b32.xlu0 %v1091, 112
          %v1205 = vpop.permute.xlu0 %1204
          %1206 = vrot.lane.b32.xlu0 %v1092, 112
          %v1207 = vpop.permute.xlu0 %1206
          %1208 = vrot.lane.b32.xlu0 %v1093, 112
          %v1209 = vpop.permute.xlu0 %1208
          %1210 = vrot.lane.b32.xlu0 %v1094, 112
          %v1211 = vpop.permute.xlu0 %1210
          %1212 = vrot.lane.b32.xlu0 %v1095, 112
          %v1213 = vpop.permute.xlu0 %1212
          %1214 = vrot.lane.b32.xlu0 %v1096, 112
          %v1215 = vpop.permute.xlu0 %1214
          %1216 = vrot.lane.b32.xlu0 %v1097, 112
          %v1217 = vpop.permute.xlu0 %1216
          %1218 = vrot.lane.b32.xlu0 %v1098, 112
          %v1219 = vpop.permute.xlu0 %1218
          %1220 = vrot.lane.b32.xlu0 %v1099, 112
          %v1221 = vpop.permute.xlu0 %1220
          %1222 = vrot.lane.b32.xlu0 %v1100, 112
          %v1223 = vpop.permute.xlu0 %1222
          %1224 = vrot.lane.b32.xlu0 %v1101, 112
          %v1225 = vpop.permute.xlu0 %1224
          %1226 = vrot.lane.b32.xlu0 %v1102, 112
          %v1227 = vpop.permute.xlu0 %1226
          %1228 = vrot.lane.b32.xlu0 %v1103, 112
          %v1229 = vpop.permute.xlu0 %1228
          %1230 = vrot.lane.b32.xlu0 %v1104, 112
          %v1231 = vpop.permute.xlu0 %1230
          %1232 = vrot.lane.b32.xlu0 %v1105, 112
          %v1233 = vpop.permute.xlu0 %1232
          %1234 = vrot.lane.b32.xlu0 %v1106, 112
          %v1235 = vpop.permute.xlu0 %1234
          %1268 = vst.msk [vmem:[#allocation4] sm:$0xf] %vm1139, %v1173
          %1269 = vst.msk [vmem:[#allocation4 + $0x4] sm:$0xf] %vm1139, %v1175
          %1270 = vst.msk [vmem:[#allocation4 + $0x8] sm:$0xf] %vm1139, %v1177
          %1271 = vst.msk [vmem:[#allocation4 + $0xc] sm:$0xf] %vm1139, %v1179
          %1272 = vst.msk [vmem:[#allocation4 + $0x10] sm:$0xf] %vm1139, %v1181
          %1273 = vst.msk [vmem:[#allocation4 + $0x14] sm:$0xf] %vm1139, %v1183
          %1274 = vst.msk [vmem:[#allocation4 + $0x18] sm:$0xf] %vm1139, %v1185
          %1275 = vst.msk [vmem:[#allocation4 + $0x1c] sm:$0xf] %vm1139, %v1187
          %1276 = vst.msk [vmem:[#allocation4 + $0x20] sm:$0xf] %vm1139, %v1189
          %1277 = vst.msk [vmem:[#allocation4 + $0x24] sm:$0xf] %vm1139, %v1191
          %1278 = vst.msk [vmem:[#allocation4 + $0x28] sm:$0xf] %vm1139, %v1193
          %1279 = vst.msk [vmem:[#allocation4 + $0x2c] sm:$0xf] %vm1139, %v1195
          %1280 = vst.msk [vmem:[#allocation4 + $0x30] sm:$0xf] %vm1139, %v1197
          %1281 = vst.msk [vmem:[#allocation4 + $0x34] sm:$0xf] %vm1139, %v1199
          %1282 = vst.msk [vmem:[#allocation4 + $0x38] sm:$0xf] %vm1139, %v1201
          %1283 = vst.msk [vmem:[#allocation4 + $0x3c] sm:$0xf] %vm1139, %v1203
          %1284 = vst.msk [vmem:[#allocation4 + $0x40] sm:$0xf] %vm1139, %v1205
          %1285 = vst.msk [vmem:[#allocation4 + $0x44] sm:$0xf] %vm1139, %v1207
          %1286 = vst.msk [vmem:[#allocation4 + $0x48] sm:$0xf] %vm1139, %v1209
          %1287 = vst.msk [vmem:[#allocation4 + $0x4c] sm:$0xf] %vm1139, %v1211
          %1288 = vst.msk [vmem:[#allocation4 + $0x50] sm:$0xf] %vm1139, %v1213
          %1289 = vst.msk [vmem:[#allocation4 + $0x54] sm:$0xf] %vm1139, %v1215
          %1290 = vst.msk [vmem:[#allocation4 + $0x58] sm:$0xf] %vm1139, %v1217
          %1291 = vst.msk [vmem:[#allocation4 + $0x5c] sm:$0xf] %vm1139, %v1219
          %1292 = vst.msk [vmem:[#allocation4 + $0x60] sm:$0xf] %vm1139, %v1221
          %1293 = vst.msk [vmem:[#allocation4 + $0x64] sm:$0xf] %vm1139, %v1223
          %1294 = vst.msk [vmem:[#allocation4 + $0x68] sm:$0xf] %vm1139, %v1225
          %1295 = vst.msk [vmem:[#allocation4 + $0x6c] sm:$0xf] %vm1139, %v1227
          %1296 = vst.msk [vmem:[#allocation4 + $0x70] sm:$0xf] %vm1139, %v1229
          %1297 = vst.msk [vmem:[#allocation4 + $0x74] sm:$0xf] %vm1139, %v1231
          %1298 = vst.msk [vmem:[#allocation4 + $0x78] sm:$0xf] %vm1139, %v1233
          %1299 = vst.msk [vmem:[#allocation4 + $0x7c] sm:$0xf] %vm1139, %v1235
        $region48: #{self_attention_2d.1} parent=43 // pred_fallthru
          _
        %s1300 = smul.u32 %s23, 128
        %s1301 = sshra.s32 %s1300, 3
        %s1302 = sand.u32 %s1300, 7
        %s1303 = smul.addr %s1301, 4
        %s1304 = scalar_lea.vmem [#allocation3], %s1303
        %v1305 = vld [vmem:[%s1304] sm:$0xf]
        %v1306 = vld [vmem:[%s1304 + $0x4] sm:$0xf]
        %v1307 = vld [vmem:[%s1304 + $0x8] sm:$0xf]
        %v1308 = vld [vmem:[%s1304 + $0xc] sm:$0xf]
        %v1309 = vld [vmem:[%s1304 + $0x10] sm:$0xf]
        %v1310 = vld [vmem:[%s1304 + $0x14] sm:$0xf]
        %v1311 = vld [vmem:[%s1304 + $0x18] sm:$0xf]
        %v1312 = vld [vmem:[%s1304 + $0x1c] sm:$0xf]
        %v1313 = vld [vmem:[%s1304 + $0x20] sm:$0xf]
        %v1314 = vld [vmem:[%s1304 + $0x24] sm:$0xf]
        %v1315 = vld [vmem:[%s1304 + $0x28] sm:$0xf]
        %v1316 = vld [vmem:[%s1304 + $0x2c] sm:$0xf]
        %v1317 = vld [vmem:[%s1304 + $0x30] sm:$0xf]
        %v1318 = vld [vmem:[%s1304 + $0x34] sm:$0xf]
        %v1319 = vld [vmem:[%s1304 + $0x38] sm:$0xf]
        %v1320 = vld [vmem:[%s1304 + $0x3c] sm:$0xf]
        %v1321 = vld [vmem:[#allocation4] sm:$0xf]
        %v1322 = vld [vmem:[#allocation4 + $0x4] sm:$0xf]
        %v1323 = vld [vmem:[#allocation4 + $0x8] sm:$0xf]
        %v1324 = vld [vmem:[#allocation4 + $0xc] sm:$0xf]
        %v1325 = vld [vmem:[#allocation4 + $0x10] sm:$0xf]
        %v1326 = vld [vmem:[#allocation4 + $0x14] sm:$0xf]
        %v1327 = vld [vmem:[#allocation4 + $0x18] sm:$0xf]
        %v1328 = vld [vmem:[#allocation4 + $0x1c] sm:$0xf]
        %v1329 = vld [vmem:[#allocation4 + $0x20] sm:$0xf]
        %v1330 = vld [vmem:[#allocation4 + $0x24] sm:$0xf]
        %v1331 = vld [vmem:[#allocation4 + $0x28] sm:$0xf]
        %v1332 = vld [vmem:[#allocation4 + $0x2c] sm:$0xf]
        %v1333 = vld [vmem:[#allocation4 + $0x30] sm:$0xf]
        %v1334 = vld [vmem:[#allocation4 + $0x34] sm:$0xf]
        %v1335 = vld [vmem:[#allocation4 + $0x38] sm:$0xf]
        %v1336 = vld [vmem:[#allocation4 + $0x3c] sm:$0xf]
        %v1337 = vld [vmem:[#allocation4 + $0x40] sm:$0xf]
        %v1338 = vld [vmem:[#allocation4 + $0x44] sm:$0xf]
        %v1339 = vld [vmem:[#allocation4 + $0x48] sm:$0xf]
        %v1340 = vld [vmem:[#allocation4 + $0x4c] sm:$0xf]
        %v1341 = vld [vmem:[#allocation4 + $0x50] sm:$0xf]
        %v1342 = vld [vmem:[#allocation4 + $0x54] sm:$0xf]
        %v1343 = vld [vmem:[#allocation4 + $0x58] sm:$0xf]
        %v1344 = vld [vmem:[#allocation4 + $0x5c] sm:$0xf]
        %v1345 = vld [vmem:[#allocation4 + $0x60] sm:$0xf]
        %v1346 = vld [vmem:[#allocation4 + $0x64] sm:$0xf]
        %v1347 = vld [vmem:[#allocation4 + $0x68] sm:$0xf]
        %v1348 = vld [vmem:[#allocation4 + $0x6c] sm:$0xf]
        %v1349 = vld [vmem:[#allocation4 + $0x70] sm:$0xf]
        %v1350 = vld [vmem:[#allocation4 + $0x74] sm:$0xf]
        %v1351 = vld [vmem:[#allocation4 + $0x78] sm:$0xf]
        %v1352 = vld [vmem:[#allocation4 + $0x7c] sm:$0xf]
        %v1369 = vunpack.c.l.b16 %v1305
        %v1370 = vunpack.c.l.b16 %v1306
        %v1371 = vunpack.c.l.b16 %v1307
        %v1372 = vunpack.c.l.b16 %v1308
        %v1373 = vunpack.c.l.b16 %v1309
        %v1374 = vunpack.c.l.b16 %v1310
        %v1375 = vunpack.c.l.b16 %v1311
        %v1376 = vunpack.c.l.b16 %v1312
        %v1377 = vunpack.c.l.b16 %v1313
        %v1378 = vunpack.c.l.b16 %v1314
        %v1379 = vunpack.c.l.b16 %v1315
        %v1380 = vunpack.c.l.b16 %v1316
        %v1381 = vunpack.c.l.b16 %v1317
        %v1382 = vunpack.c.l.b16 %v1318
        %v1383 = vunpack.c.l.b16 %v1319
        %v1384 = vunpack.c.l.b16 %v1320
        %v1385 = vpack.c.b16 %v1370, %v1369
        %v1386 = vpack.c.b16 %v1372, %v1371
        %v1387 = vpack.c.b16 %v1374, %v1373
        %v1388 = vpack.c.b16 %v1376, %v1375
        %v1389 = vpack.c.b16 %v1378, %v1377
        %v1390 = vpack.c.b16 %v1380, %v1379
        %v1391 = vpack.c.b16 %v1382, %v1381
        %v1392 = vpack.c.b16 %v1384, %v1383
        %v1425 = vunpack.c.l.b16 %v1321
        %v1426 = vunpack.c.l.b16 %v1322
        %v1427 = vunpack.c.l.b16 %v1323
        %v1428 = vunpack.c.l.b16 %v1324
        %v1429 = vunpack.c.l.b16 %v1325
        %v1430 = vunpack.c.l.b16 %v1326
        %v1431 = vunpack.c.l.b16 %v1327
        %v1432 = vunpack.c.l.b16 %v1328
        %v1433 = vunpack.c.l.b16 %v1329
        %v1434 = vunpack.c.l.b16 %v1330
        %v1435 = vunpack.c.l.b16 %v1331
        %v1436 = vunpack.c.l.b16 %v1332
        %v1437 = vunpack.c.l.b16 %v1333
        %v1438 = vunpack.c.l.b16 %v1334
        %v1439 = vunpack.c.l.b16 %v1335
        %v1440 = vunpack.c.l.b16 %v1336
        %v1441 = vunpack.c.l.b16 %v1337
        %v1442 = vunpack.c.l.b16 %v1338
        %v1443 = vunpack.c.l.b16 %v1339
        %v1444 = vunpack.c.l.b16 %v1340
        %v1445 = vunpack.c.l.b16 %v1341
        %v1446 = vunpack.c.l.b16 %v1342
        %v1447 = vunpack.c.l.b16 %v1343
        %v1448 = vunpack.c.l.b16 %v1344
        %v1449 = vunpack.c.l.b16 %v1345
        %v1450 = vunpack.c.l.b16 %v1346
        %v1451 = vunpack.c.l.b16 %v1347
        %v1452 = vunpack.c.l.b16 %v1348
        %v1453 = vunpack.c.l.b16 %v1349
        %v1454 = vunpack.c.l.b16 %v1350
        %v1455 = vunpack.c.l.b16 %v1351
        %v1456 = vunpack.c.l.b16 %v1352
        %v1457 = vpack.c.b16 %v1426, %v1425
        %v1458 = vpack.c.b16 %v1428, %v1427
        %v1459 = vpack.c.b16 %v1430, %v1429
        %v1460 = vpack.c.b16 %v1432, %v1431
        %v1461 = vpack.c.b16 %v1434, %v1433
        %v1462 = vpack.c.b16 %v1436, %v1435
        %v1463 = vpack.c.b16 %v1438, %v1437
        %v1464 = vpack.c.b16 %v1440, %v1439
        %v1465 = vpack.c.b16 %v1442, %v1441
        %v1466 = vpack.c.b16 %v1444, %v1443
        %v1467 = vpack.c.b16 %v1446, %v1445
        %v1468 = vpack.c.b16 %v1448, %v1447
        %v1469 = vpack.c.b16 %v1450, %v1449
        %v1470 = vpack.c.b16 %v1452, %v1451
        %v1471 = vpack.c.b16 %v1454, %v1453
        %v1472 = vpack.c.b16 %v1456, %v1455
        %vm1473 = vcmask 130048
        %v1475 = vsel %vm1473, %v1385, 0
        %v1478 = vsel %vm1473, %v1386, 0
        %v1481 = vsel %vm1473, %v1387, 0
        %v1484 = vsel %vm1473, %v1388, 0
        %v1487 = vsel %vm1473, %v1389, 0
        %v1490 = vsel %vm1473, %v1390, 0
        %v1493 = vsel %vm1473, %v1391, 0
        %v1496 = vsel %vm1473, %v1392, 0
        %v1499 = vsel %vm1473, %v1457, 0
        %v1502 = vsel %vm1473, %v1458, 0
        %v1505 = vsel %vm1473, %v1459, 0
        %v1508 = vsel %vm1473, %v1460, 0
        %v1511 = vsel %vm1473, %v1461, 0
        %v1514 = vsel %vm1473, %v1462, 0
        %v1517 = vsel %vm1473, %v1463, 0
        %v1520 = vsel %vm1473, %v1464, 0
        %v1523 = vsel %vm1473, %v1465, 0
        %v1526 = vsel %vm1473, %v1466, 0
        %v1529 = vsel %vm1473, %v1467, 0
        %v1532 = vsel %vm1473, %v1468, 0
        %v1535 = vsel %vm1473, %v1469, 0
        %v1538 = vsel %vm1473, %v1470, 0
        %v1541 = vsel %vm1473, %v1471, 0
        %v1544 = vsel %vm1473, %v1472, 0
        %1546 = vmatprep.subr.bf16.mxu0 0
        %1547 = vmatpush1.bf16.xpose.msra.mxu0 %v1520
        %1548 = vmatprep.subr.bf16.mxu0 0
        %1549 = vmatpush1.bf16.xpose.msra.mxu0 %v1517
        %1550 = vmatprep.subr.bf16.mxu0 0
        %1551 = vmatpush1.bf16.xpose.msra.mxu0 %v1514
        %1552 = vmatprep.subr.bf16.mxu0 0
        %1553 = vmatpush1.bf16.xpose.msra.mxu0 %v1511
        %1554 = vmatprep.subr.bf16.mxu0 0
        %1555 = vmatpush1.bf16.xpose.msra.mxu0 %v1508
        %1556 = vmatprep.subr.bf16.mxu0 0
        %1557 = vmatpush1.bf16.xpose.msra.mxu0 %v1505
        %1558 = vmatprep.subr.bf16.mxu0 0
        %1559 = vmatpush1.bf16.xpose.msra.mxu0 %v1502
        %1560 = vmatprep.subr.bf16.mxu0 0
        %1561 = vmatpush1.bf16.xpose.msra.mxu0 %v1499
        %1562 = vmatprep.subr.bf16.mxu0 0
        %1563 = vmatpush2.bf16.xpose.msra.mxu0 %v1544
        %1564 = vmatprep.subr.bf16.mxu0 0
        %1565 = vmatpush2.bf16.xpose.msra.mxu0 %v1541
        %1566 = vmatprep.subr.bf16.mxu0 0
        %1567 = vmatpush2.bf16.xpose.msra.mxu0 %v1538
        %1568 = vmatprep.subr.bf16.mxu0 0
        %1569 = vmatpush2.bf16.xpose.msra.mxu0 %v1535
        %1570 = vmatprep.subr.bf16.mxu0 0
        %1571 = vmatpush2.bf16.xpose.msra.mxu0 %v1532
        %1572 = vmatprep.subr.bf16.mxu0 0
        %1573 = vmatpush2.bf16.xpose.msra.mxu0 %v1529
        %1574 = vmatprep.subr.bf16.mxu0 0
        %1575 = vmatpush2.bf16.xpose.msra.mxu0 %v1526
        %1576 = vmatprep.subr.bf16.mxu0 0
        %1577 = vmatpush2.bf16.xpose.msra.mxu0 %v1523
        %1578 = vmatprep.mubr.bf16.mxu0 0
        %1579 = vmatmul.mubr.bf16.gmra.mxu0 %v1475
        %v1580 = vpop.f32.mrf.mxu0
        %v1581 = vadd.f32 0.0, %v1580
        %v1582 = vpop.f32.mrf.mxu0
        %v1583 = vadd.f32 0.0, %v1582
        %v1584 = vpop.f32.mrf.mxu0
        %v1585 = vadd.f32 0.0, %v1584
        %v1586 = vpop.f32.mrf.mxu0
        %v1587 = vadd.f32 0.0, %v1586
        %1588 = vmatprep.mubr.bf16.mxu0 0
        %1589 = vmatmul.mubr.bf16.gmra.mxu0 %v1478
        %v1590 = vpop.f32.mrf.mxu0
        %v1591 = vadd.f32 0.0, %v1590
        %v1592 = vpop.f32.mrf.mxu0
        %v1593 = vadd.f32 0.0, %v1592
        %v1594 = vpop.f32.mrf.mxu0
        %v1595 = vadd.f32 0.0, %v1594
        %v1596 = vpop.f32.mrf.mxu0
        %v1597 = vadd.f32 0.0, %v1596
        %1598 = vmatprep.mubr.bf16.mxu0 0
        %1599 = vmatmul.mubr.bf16.gmra.mxu0 %v1481
        %v1600 = vpop.f32.mrf.mxu0
        %v1601 = vadd.f32 0.0, %v1600
        %v1602 = vpop.f32.mrf.mxu0
        %v1603 = vadd.f32 0.0, %v1602
        %v1604 = vpop.f32.mrf.mxu0
        %v1605 = vadd.f32 0.0, %v1604
        %v1606 = vpop.f32.mrf.mxu0
        %v1607 = vadd.f32 0.0, %v1606
        %1608 = vmatprep.mubr.bf16.mxu0 0
        %1609 = vmatmul.mubr.bf16.gmra.mxu0 %v1484
        %v1610 = vpop.f32.mrf.mxu0
        %v1611 = vadd.f32 0.0, %v1610
        %v1612 = vpop.f32.mrf.mxu0
        %v1613 = vadd.f32 0.0, %v1612
        %v1614 = vpop.f32.mrf.mxu0
        %v1615 = vadd.f32 0.0, %v1614
        %v1616 = vpop.f32.mrf.mxu0
        %v1617 = vadd.f32 0.0, %v1616
        %1618 = vmatprep.mubr.bf16.mxu0 0
        %1619 = vmatmul.mubr.bf16.gmra.mxu0 %v1487
        %v1620 = vpop.f32.mrf.mxu0
        %v1621 = vadd.f32 0.0, %v1620
        %v1622 = vpop.f32.mrf.mxu0
        %v1623 = vadd.f32 0.0, %v1622
        %v1624 = vpop.f32.mrf.mxu0
        %v1625 = vadd.f32 0.0, %v1624
        %v1626 = vpop.f32.mrf.mxu0
        %v1627 = vadd.f32 0.0, %v1626
        %1628 = vmatprep.mubr.bf16.mxu0 0
        %1629 = vmatmul.mubr.bf16.gmra.mxu0 %v1490
        %v1630 = vpop.f32.mrf.mxu0
        %v1631 = vadd.f32 0.0, %v1630
        %v1632 = vpop.f32.mrf.mxu0
        %v1633 = vadd.f32 0.0, %v1632
        %v1634 = vpop.f32.mrf.mxu0
        %v1635 = vadd.f32 0.0, %v1634
        %v1636 = vpop.f32.mrf.mxu0
        %v1637 = vadd.f32 0.0, %v1636
        %1638 = vmatprep.mubr.bf16.mxu0 0
        %1639 = vmatmul.mubr.bf16.gmra.mxu0 %v1493
        %v1640 = vpop.f32.mrf.mxu0
        %v1641 = vadd.f32 0.0, %v1640
        %v1642 = vpop.f32.mrf.mxu0
        %v1643 = vadd.f32 0.0, %v1642
        %v1644 = vpop.f32.mrf.mxu0
        %v1645 = vadd.f32 0.0, %v1644
        %v1646 = vpop.f32.mrf.mxu0
        %v1647 = vadd.f32 0.0, %v1646
        %1648 = vmatprep.mubr.bf16.mxu0 0
        %1649 = vmatmul.mubr.bf16.gmra.mxu0 %v1496
        %v1650 = vpop.f32.mrf.mxu0
        %v1651 = vadd.f32 0.0, %v1650
        %v1652 = vpop.f32.mrf.mxu0
        %v1653 = vadd.f32 0.0, %v1652
        %v1654 = vpop.f32.mrf.mxu0
        %v1655 = vadd.f32 0.0, %v1654
        %v1656 = vpop.f32.mrf.mxu0
        %v1657 = vadd.f32 0.0, %v1656
        %1658 = vdwg.mxu0
        %v1659 = vmax.f32 %v1581, %v1583
        %1660 = vmax.xlane.f32.xlu0 %v1659
        %v1661 = vpop.xlane.xlu0 %1660
        %v1662 = vmax.f32 %v1585, %v1587
        %1663 = vmax.xlane.f32.xlu0 %v1662
        %v1664 = vpop.xlane.xlu0 %1663
        %v1665 = vmax.f32 %v1591, %v1593
        %1666 = vmax.xlane.f32.xlu0 %v1665
        %v1667 = vpop.xlane.xlu0 %1666
        %v1668 = vmax.f32 %v1595, %v1597
        %1669 = vmax.xlane.f32.xlu0 %v1668
        %v1670 = vpop.xlane.xlu0 %1669
        %v1671 = vmax.f32 %v1601, %v1603
        %1672 = vmax.xlane.f32.xlu0 %v1671
        %v1673 = vpop.xlane.xlu0 %1672
        %v1674 = vmax.f32 %v1605, %v1607
        %1675 = vmax.xlane.f32.xlu0 %v1674
        %v1676 = vpop.xlane.xlu0 %1675
        %v1677 = vmax.f32 %v1611, %v1613
        %1678 = vmax.xlane.f32.xlu0 %v1677
        %v1679 = vpop.xlane.xlu0 %1678
        %v1680 = vmax.f32 %v1615, %v1617
        %1681 = vmax.xlane.f32.xlu0 %v1680
        %v1682 = vpop.xlane.xlu0 %1681
        %v1683 = vmax.f32 %v1621, %v1623
        %1684 = vmax.xlane.f32.xlu0 %v1683
        %v1685 = vpop.xlane.xlu0 %1684
        %v1686 = vmax.f32 %v1625, %v1627
        %1687 = vmax.xlane.f32.xlu0 %v1686
        %v1688 = vpop.xlane.xlu0 %1687
        %v1689 = vmax.f32 %v1631, %v1633
        %1690 = vmax.xlane.f32.xlu0 %v1689
        %v1691 = vpop.xlane.xlu0 %1690
        %v1692 = vmax.f32 %v1635, %v1637
        %1693 = vmax.xlane.f32.xlu0 %v1692
        %v1694 = vpop.xlane.xlu0 %1693
        %v1695 = vmax.f32 %v1641, %v1643
        %1696 = vmax.xlane.f32.xlu0 %v1695
        %v1697 = vpop.xlane.xlu0 %1696
        %v1698 = vmax.f32 %v1645, %v1647
        %1699 = vmax.xlane.f32.xlu0 %v1698
        %v1700 = vpop.xlane.xlu0 %1699
        %v1701 = vmax.f32 %v1651, %v1653
        %1702 = vmax.xlane.f32.xlu0 %v1701
        %v1703 = vpop.xlane.xlu0 %1702
        %v1704 = vmax.f32 %v1655, %v1657
        %1705 = vmax.xlane.f32.xlu0 %v1704
        %v1706 = vpop.xlane.xlu0 %1705
        %v1707 = vsub.f32 %v1581, %v1661
        %v1708 = vsub.f32 %v1583, %v1661
        %v1709 = vsub.f32 %v1585, %v1664
        %v1710 = vsub.f32 %v1587, %v1664
        %v1711 = vsub.f32 %v1591, %v1667
        %v1712 = vsub.f32 %v1593, %v1667
        %v1713 = vsub.f32 %v1595, %v1670
        %v1714 = vsub.f32 %v1597, %v1670
        %v1715 = vsub.f32 %v1601, %v1673
        %v1716 = vsub.f32 %v1603, %v1673
        %v1717 = vsub.f32 %v1605, %v1676
        %v1718 = vsub.f32 %v1607, %v1676
        %v1719 = vsub.f32 %v1611, %v1679
        %v1720 = vsub.f32 %v1613, %v1679
        %v1721 = vsub.f32 %v1615, %v1682
        %v1722 = vsub.f32 %v1617, %v1682
        %v1723 = vsub.f32 %v1621, %v1685
        %v1724 = vsub.f32 %v1623, %v1685
        %v1725 = vsub.f32 %v1625, %v1688
        %v1726 = vsub.f32 %v1627, %v1688
        %v1727 = vsub.f32 %v1631, %v1691
        %v1728 = vsub.f32 %v1633, %v1691
        %v1729 = vsub.f32 %v1635, %v1694
        %v1730 = vsub.f32 %v1637, %v1694
        %v1731 = vsub.f32 %v1641, %v1697
        %v1732 = vsub.f32 %v1643, %v1697
        %v1733 = vsub.f32 %v1645, %v1700
        %v1734 = vsub.f32 %v1647, %v1700
        %v1735 = vsub.f32 %v1651, %v1703
        %v1736 = vsub.f32 %v1653, %v1703
        %v1737 = vsub.f32 %v1655, %v1706
        %v1738 = vsub.f32 %v1657, %v1706
        %v1739 = vmul.f32 %v1707, 1.442695
        %v1740 = vpow.pop %v1739
        %v1741 = vmul.f32 %v1708, 1.442695
        %v1742 = vpow.pop %v1741
        %v1743 = vmul.f32 %v1709, 1.442695
        %v1744 = vpow.pop %v1743
        %v1745 = vmul.f32 %v1710, 1.442695
        %v1746 = vpow.pop %v1745
        %v1747 = vmul.f32 %v1711, 1.442695
        %v1748 = vpow.pop %v1747
        %v1749 = vmul.f32 %v1712, 1.442695
        %v1750 = vpow.pop %v1749
        %v1751 = vmul.f32 %v1713, 1.442695
        %v1752 = vpow.pop %v1751
        %v1753 = vmul.f32 %v1714, 1.442695
        %v1754 = vpow.pop %v1753
        %v1755 = vmul.f32 %v1715, 1.442695
        %v1756 = vpow.pop %v1755
        %v1757 = vmul.f32 %v1716, 1.442695
        %v1758 = vpow.pop %v1757
        %v1759 = vmul.f32 %v1717, 1.442695
        %v1760 = vpow.pop %v1759
        %v1761 = vmul.f32 %v1718, 1.442695
        %v1762 = vpow.pop %v1761
        %v1763 = vmul.f32 %v1719, 1.442695
        %v1764 = vpow.pop %v1763
        %v1765 = vmul.f32 %v1720, 1.442695
        %v1766 = vpow.pop %v1765
        %v1767 = vmul.f32 %v1721, 1.442695
        %v1768 = vpow.pop %v1767
        %v1769 = vmul.f32 %v1722, 1.442695
        %v1770 = vpow.pop %v1769
        %v1771 = vmul.f32 %v1723, 1.442695
        %v1772 = vpow.pop %v1771
        %v1773 = vmul.f32 %v1724, 1.442695
        %v1774 = vpow.pop %v1773
        %v1775 = vmul.f32 %v1725, 1.442695
        %v1776 = vpow.pop %v1775
        %v1777 = vmul.f32 %v1726, 1.442695
        %v1778 = vpow.pop %v1777
        %v1779 = vmul.f32 %v1727, 1.442695
        %v1780 = vpow.pop %v1779
        %v1781 = vmul.f32 %v1728, 1.442695
        %v1782 = vpow.pop %v1781
        %v1783 = vmul.f32 %v1729, 1.442695
        %v1784 = vpow.pop %v1783
        %v1785 = vmul.f32 %v1730, 1.442695
        %v1786 = vpow.pop %v1785
        %v1787 = vmul.f32 %v1731, 1.442695
        %v1788 = vpow.pop %v1787
        %v1789 = vmul.f32 %v1732, 1.442695
        %v1790 = vpow.pop %v1789
        %v1791 = vmul.f32 %v1733, 1.442695
        %v1792 = vpow.pop %v1791
        %v1793 = vmul.f32 %v1734, 1.442695
        %v1794 = vpow.pop %v1793
        %v1795 = vmul.f32 %v1735, 1.442695
        %v1796 = vpow.pop %v1795
        %v1797 = vmul.f32 %v1736, 1.442695
        %v1798 = vpow.pop %v1797
        %v1799 = vmul.f32 %v1737, 1.442695
        %v1800 = vpow.pop %v1799
        %v1801 = vmul.f32 %v1738, 1.442695
        %v1802 = vpow.pop %v1801
        %v1803 = vadd.f32 %v1740, %v1742
        %1804 = vadd.xlane.f32.xlu0 %v1803
        %v1805 = vpop.xlane.xlu0 %1804
        %v1806 = vadd.f32 %v1744, %v1746
        %1807 = vadd.xlane.f32.xlu0 %v1806
        %v1808 = vpop.xlane.xlu0 %1807
        %v1809 = vadd.f32 %v1748, %v1750
        %1810 = vadd.xlane.f32.xlu0 %v1809
        %v1811 = vpop.xlane.xlu0 %1810
        %v1812 = vadd.f32 %v1752, %v1754
        %1813 = vadd.xlane.f32.xlu0 %v1812
        %v1814 = vpop.xlane.xlu0 %1813
        %v1815 = vadd.f32 %v1756, %v1758
        %1816 = vadd.xlane.f32.xlu0 %v1815
        %v1817 = vpop.xlane.xlu0 %1816
        %v1818 = vadd.f32 %v1760, %v1762
        %1819 = vadd.xlane.f32.xlu0 %v1818
        %v1820 = vpop.xlane.xlu0 %1819
        %v1821 = vadd.f32 %v1764, %v1766
        %1822 = vadd.xlane.f32.xlu0 %v1821
        %v1823 = vpop.xlane.xlu0 %1822
        %v1824 = vadd.f32 %v1768, %v1770
        %1825 = vadd.xlane.f32.xlu0 %v1824
        %v1826 = vpop.xlane.xlu0 %1825
        %v1827 = vadd.f32 %v1772, %v1774
        %1828 = vadd.xlane.f32.xlu0 %v1827
        %v1829 = vpop.xlane.xlu0 %1828
        %v1830 = vadd.f32 %v1776, %v1778
        %1831 = vadd.xlane.f32.xlu0 %v1830
        %v1832 = vpop.xlane.xlu0 %1831
        %v1833 = vadd.f32 %v1780, %v1782
        %1834 = vadd.xlane.f32.xlu0 %v1833
        %v1835 = vpop.xlane.xlu0 %1834
        %v1836 = vadd.f32 %v1784, %v1786
        %1837 = vadd.xlane.f32.xlu0 %v1836
        %v1838 = vpop.xlane.xlu0 %1837
        %v1839 = vadd.f32 %v1788, %v1790
        %1840 = vadd.xlane.f32.xlu0 %v1839
        %v1841 = vpop.xlane.xlu0 %1840
        %v1842 = vadd.f32 %v1792, %v1794
        %1843 = vadd.xlane.f32.xlu0 %v1842
        %v1844 = vpop.xlane.xlu0 %1843
        %v1845 = vadd.f32 %v1796, %v1798
        %1846 = vadd.xlane.f32.xlu0 %v1845
        %v1847 = vpop.xlane.xlu0 %1846
        %v1848 = vadd.f32 %v1800, %v1802
        %1849 = vadd.xlane.f32.xlu0 %v1848
        %v1850 = vpop.xlane.xlu0 %1849
        %v1851 = vrcp.pop %v1805
        %v1852 = vrcp.pop %v1808
        %v1853 = vrcp.pop %v1811
        %v1854 = vrcp.pop %v1814
        %v1855 = vrcp.pop %v1817
        %v1856 = vrcp.pop %v1820
        %v1857 = vrcp.pop %v1823
        %v1858 = vrcp.pop %v1826
        %v1859 = vrcp.pop %v1829
        %v1860 = vrcp.pop %v1832
        %v1861 = vrcp.pop %v1835
        %v1862 = vrcp.pop %v1838
        %v1863 = vrcp.pop %v1841
        %v1864 = vrcp.pop %v1844
        %v1865 = vrcp.pop %v1847
        %v1866 = vrcp.pop %v1850
        %v1867 = vmul.f32 %v1740, %v1851
        %v1868 = vmul.f32 %v1742, %v1851
        %v1869 = vmul.f32 %v1744, %v1852
        %v1870 = vmul.f32 %v1746, %v1852
        %v1871 = vmul.f32 %v1748, %v1853
        %v1872 = vmul.f32 %v1750, %v1853
        %v1873 = vmul.f32 %v1752, %v1854
        %v1874 = vmul.f32 %v1754, %v1854
        %v1875 = vmul.f32 %v1756, %v1855
        %v1876 = vmul.f32 %v1758, %v1855
        %v1877 = vmul.f32 %v1760, %v1856
        %v1878 = vmul.f32 %v1762, %v1856
        %v1879 = vmul.f32 %v1764, %v1857
        %v1880 = vmul.f32 %v1766, %v1857
        %v1881 = vmul.f32 %v1768, %v1858
        %v1882 = vmul.f32 %v1770, %v1858
        %v1883 = vmul.f32 %v1772, %v1859
        %v1884 = vmul.f32 %v1774, %v1859
        %v1885 = vmul.f32 %v1776, %v1860
        %v1886 = vmul.f32 %v1778, %v1860
        %v1887 = vmul.f32 %v1780, %v1861
        %v1888 = vmul.f32 %v1782, %v1861
        %v1889 = vmul.f32 %v1784, %v1862
        %v1890 = vmul.f32 %v1786, %v1862
        %v1891 = vmul.f32 %v1788, %v1863
        %v1892 = vmul.f32 %v1790, %v1863
        %v1893 = vmul.f32 %v1792, %v1864
        %v1894 = vmul.f32 %v1794, %v1864
        %v1895 = vmul.f32 %v1796, %v1865
        %v1896 = vmul.f32 %v1798, %v1865
        %v1897 = vmul.f32 %v1800, %v1866
        %v1898 = vmul.f32 %v1802, %v1866
        %v1899 = vpack.c.bf16 %v1869, %v1867
        %v1900 = vpack.c.bf16 %v1870, %v1868
        %v1901 = vpack.c.bf16 %v1873, %v1871
        %v1902 = vpack.c.bf16 %v1874, %v1872
        %v1903 = vpack.c.bf16 %v1877, %v1875
        %v1904 = vpack.c.bf16 %v1878, %v1876
        %v1905 = vpack.c.bf16 %v1881, %v1879
        %v1906 = vpack.c.bf16 %v1882, %v1880
        %v1907 = vpack.c.bf16 %v1885, %v1883
        %v1908 = vpack.c.bf16 %v1886, %v1884
        %v1909 = vpack.c.bf16 %v1889, %v1887
        %v1910 = vpack.c.bf16 %v1890, %v1888
        %v1911 = vpack.c.bf16 %v1893, %v1891
        %v1912 = vpack.c.bf16 %v1894, %v1892
        %v1913 = vpack.c.bf16 %v1897, %v1895
        %v1914 = vpack.c.bf16 %v1898, %v1896
        %v1915 = vld [vmem:[#allocation2] sm:$0xff]
        %v1916 = vld [vmem:[#allocation2 + $0x8] sm:$0xff]
        %v1917 = vld [vmem:[#allocation2 + $0x10] sm:$0xff]
        %v1918 = vld [vmem:[#allocation2 + $0x18] sm:$0xff]
        %v1919 = vld [vmem:[#allocation2 + $0x20] sm:$0xff]
        %v1920 = vld [vmem:[#allocation2 + $0x28] sm:$0xff]
        %v1921 = vld [vmem:[#allocation2 + $0x30] sm:$0xff]
        %v1922 = vld [vmem:[#allocation2 + $0x38] sm:$0xff]
        %v1923 = vld [vmem:[#allocation2 + $0x40] sm:$0xff]
        %v1924 = vld [vmem:[#allocation2 + $0x48] sm:$0xff]
        %v1925 = vld [vmem:[#allocation2 + $0x50] sm:$0xff]
        %v1926 = vld [vmem:[#allocation2 + $0x58] sm:$0xff]
        %v1927 = vld [vmem:[#allocation2 + $0x60] sm:$0xff]
        %v1928 = vld [vmem:[#allocation2 + $0x68] sm:$0xff]
        %v1929 = vld [vmem:[#allocation2 + $0x70] sm:$0xff]
        %v1930 = vld [vmem:[#allocation2 + $0x78] sm:$0xff]
        %v1947 = vunpack.c.l.b16 %v1915
        %v1948 = vunpack.c.h.b16 %v1915
        %v1949 = vunpack.c.l.b16 %v1916
        %v1950 = vunpack.c.h.b16 %v1916
        %v1951 = vunpack.c.l.b16 %v1917
        %v1952 = vunpack.c.h.b16 %v1917
        %v1953 = vunpack.c.l.b16 %v1918
        %v1954 = vunpack.c.h.b16 %v1918
        %v1955 = vunpack.c.l.b16 %v1919
        %v1956 = vunpack.c.h.b16 %v1919
        %v1957 = vunpack.c.l.b16 %v1920
        %v1958 = vunpack.c.h.b16 %v1920
        %v1959 = vunpack.c.l.b16 %v1921
        %v1960 = vunpack.c.h.b16 %v1921
        %v1961 = vunpack.c.l.b16 %v1922
        %v1962 = vunpack.c.h.b16 %v1922
        %v1963 = vunpack.c.l.b16 %v1923
        %v1964 = vunpack.c.h.b16 %v1923
        %v1965 = vunpack.c.l.b16 %v1924
        %v1966 = vunpack.c.h.b16 %v1924
        %v1967 = vunpack.c.l.b16 %v1925
        %v1968 = vunpack.c.h.b16 %v1925
        %v1969 = vunpack.c.l.b16 %v1926
        %v1970 = vunpack.c.h.b16 %v1926
        %v1971 = vunpack.c.l.b16 %v1927
        %v1972 = vunpack.c.h.b16 %v1927
        %v1973 = vunpack.c.l.b16 %v1928
        %v1974 = vunpack.c.h.b16 %v1928
        %v1975 = vunpack.c.l.b16 %v1929
        %v1976 = vunpack.c.h.b16 %v1929
        %v1977 = vunpack.c.l.b16 %v1930
        %v1978 = vunpack.c.h.b16 %v1930
        %v1979 = vpack.c.b16 %v1949, %v1947
        %v1980 = vpack.c.b16 %v1950, %v1948
        %v1981 = vpack.c.b16 %v1953, %v1951
        %v1982 = vpack.c.b16 %v1954, %v1952
        %v1983 = vpack.c.b16 %v1957, %v1955
        %v1984 = vpack.c.b16 %v1958, %v1956
        %v1985 = vpack.c.b16 %v1961, %v1959
        %v1986 = vpack.c.b16 %v1962, %v1960
        %v1987 = vpack.c.b16 %v1965, %v1963
        %v1988 = vpack.c.b16 %v1966, %v1964
        %v1989 = vpack.c.b16 %v1969, %v1967
        %v1990 = vpack.c.b16 %v1970, %v1968
        %v1991 = vpack.c.b16 %v1973, %v1971
        %v1992 = vpack.c.b16 %v1974, %v1972
        %v1993 = vpack.c.b16 %v1977, %v1975
        %v1994 = vpack.c.b16 %v1978, %v1976
        %2011 = vmatprep.subr.bf16.mxu0 %v1914
        %2012 = vmatpush1.bf16.xpose.msra.mxu0 %v1913
        %2013 = vmatprep.subr.bf16.mxu0 %v1912
        %2014 = vmatpush1.bf16.xpose.msra.mxu0 %v1911
        %2015 = vmatprep.subr.bf16.mxu0 %v1910
        %2016 = vmatpush1.bf16.xpose.msra.mxu0 %v1909
        %2017 = vmatprep.subr.bf16.mxu0 %v1908
        %2018 = vmatpush1.bf16.xpose.msra.mxu0 %v1907
        %2019 = vmatprep.subr.bf16.mxu0 %v1906
        %2020 = vmatpush1.bf16.xpose.msra.mxu0 %v1905
        %2021 = vmatprep.subr.bf16.mxu0 %v1904
        %2022 = vmatpush1.bf16.xpose.msra.mxu0 %v1903
        %2023 = vmatprep.subr.bf16.mxu0 %v1902
        %2024 = vmatpush1.bf16.xpose.msra.mxu0 %v1901
        %2025 = vmatprep.subr.bf16.mxu0 %v1900
        %2026 = vmatpush1.bf16.xpose.msra.mxu0 %v1899
        %2027 = vmatprep.subr.bf16.mxu0 0
        %2028 = vmatpush2.bf16.xpose.msra.mxu0 0
        %2029 = vmatprep.subr.bf16.mxu0 0
        %2030 = vmatpush2.bf16.xpose.msra.mxu0 0
        %2031 = vmatprep.subr.bf16.mxu0 0
        %2032 = vmatpush2.bf16.xpose.msra.mxu0 0
        %2033 = vmatprep.subr.bf16.mxu0 0
        %2034 = vmatpush2.bf16.xpose.msra.mxu0 0
        %2035 = vmatprep.subr.bf16.mxu0 0
        %2036 = vmatpush2.bf16.xpose.msra.mxu0 0
        %2037 = vmatprep.subr.bf16.mxu0 0
        %2038 = vmatpush2.bf16.xpose.msra.mxu0 0
        %2039 = vmatprep.subr.bf16.mxu0 0
        %2040 = vmatpush2.bf16.xpose.msra.mxu0 0
        %2041 = vmatprep.subr.bf16.mxu0 0
        %2042 = vmatpush2.bf16.xpose.msra.mxu0 0
        %2043 = vmatprep.mubr.bf16.mxu0 %v1980
        %2044 = vmatmul.mubr.bf16.gmra.mxu0 %v1979
        %v2045 = vpop.f32.mrf.mxu0
        %v2046 = vadd.f32 0.0, %v2045
        %v2047 = vpop.f32.mrf.mxu0
        %v2048 = vpop.f32.mrf.mxu0
        %v2049 = vadd.f32 0.0, %v2048
        %v2050 = vpop.f32.mrf.mxu0
        %2051 = vmatprep.mubr.bf16.mxu0 %v1982
        %2052 = vmatmul.mubr.bf16.gmra.mxu0 %v1981
        %v2053 = vpop.f32.mrf.mxu0
        %v2054 = vadd.f32 0.0, %v2053
        %v2055 = vpop.f32.mrf.mxu0
        %v2056 = vpop.f32.mrf.mxu0
        %v2057 = vadd.f32 0.0, %v2056
        %v2058 = vpop.f32.mrf.mxu0
        %2059 = vmatprep.mubr.bf16.mxu0 %v1984
        %2060 = vmatmul.mubr.bf16.gmra.mxu0 %v1983
        %v2061 = vpop.f32.mrf.mxu0
        %v2062 = vadd.f32 0.0, %v2061
        %v2063 = vpop.f32.mrf.mxu0
        %v2064 = vpop.f32.mrf.mxu0
        %v2065 = vadd.f32 0.0, %v2064
        %v2066 = vpop.f32.mrf.mxu0
        %2067 = vmatprep.mubr.bf16.mxu0 %v1986
        %2068 = vmatmul.mubr.bf16.gmra.mxu0 %v1985
        %v2069 = vpop.f32.mrf.mxu0
        %v2070 = vadd.f32 0.0, %v2069
        %v2071 = vpop.f32.mrf.mxu0
        %v2072 = vpop.f32.mrf.mxu0
        %v2073 = vadd.f32 0.0, %v2072
        %v2074 = vpop.f32.mrf.mxu0
        %2075 = vmatprep.mubr.bf16.mxu0 %v1988
        %2076 = vmatmul.mubr.bf16.gmra.mxu0 %v1987
        %v2077 = vpop.f32.mrf.mxu0
        %v2078 = vadd.f32 0.0, %v2077
        %v2079 = vpop.f32.mrf.mxu0
        %v2080 = vpop.f32.mrf.mxu0
        %v2081 = vadd.f32 0.0, %v2080
        %v2082 = vpop.f32.mrf.mxu0
        %2083 = vmatprep.mubr.bf16.mxu0 %v1990
        %2084 = vmatmul.mubr.bf16.gmra.mxu0 %v1989
        %v2085 = vpop.f32.mrf.mxu0
        %v2086 = vadd.f32 0.0, %v2085
        %v2087 = vpop.f32.mrf.mxu0
        %v2088 = vpop.f32.mrf.mxu0
        %v2089 = vadd.f32 0.0, %v2088
        %v2090 = vpop.f32.mrf.mxu0
        %2091 = vmatprep.mubr.bf16.mxu0 %v1992
        %2092 = vmatmul.mubr.bf16.gmra.mxu0 %v1991
        %v2093 = vpop.f32.mrf.mxu0
        %v2094 = vadd.f32 0.0, %v2093
        %v2095 = vpop.f32.mrf.mxu0
        %v2096 = vpop.f32.mrf.mxu0
        %v2097 = vadd.f32 0.0, %v2096
        %v2098 = vpop.f32.mrf.mxu0
        %2099 = vmatprep.mubr.bf16.mxu0 %v1994
        %2100 = vmatmul.mubr.bf16.gmra.mxu0 %v1993
        %v2101 = vpop.f32.mrf.mxu0
        %v2102 = vadd.f32 0.0, %v2101
        %v2103 = vpop.f32.mrf.mxu0
        %v2104 = vpop.f32.mrf.mxu0
        %v2105 = vadd.f32 0.0, %v2104
        %v2106 = vpop.f32.mrf.mxu0
        %2107 = vdwg.mxu0
        %s2108 = sshra.s32 %s1300, 7
        %s2109 = sand.u32 %s1300, 127
        %s2110 = smul.addr %s2108, 8
        %s2111 = scalar_lea.vmem %s260, %s2110
        %v2112 = vld [vmem:[%s2111] sm:$0xff]
        %v2113 = vld [vmem:[%s2111 + $0x10] sm:$0xff]
        %v2114 = vld [vmem:[%s2111 + $0x20] sm:$0xff]
        %v2115 = vld [vmem:[%s2111 + $0x30] sm:$0xff]
        %v2116 = vld [vmem:[%s2111 + $0x40] sm:$0xff]
        %v2117 = vld [vmem:[%s2111 + $0x50] sm:$0xff]
        %v2118 = vld [vmem:[%s2111 + $0x60] sm:$0xff]
        %v2119 = vld [vmem:[%s2111 + $0x70] sm:$0xff]
        %v2120 = vld [vmem:[%s2111 + $0x80] sm:$0xff]
        %v2121 = vld [vmem:[%s2111 + $0x90] sm:$0xff]
        %v2122 = vld [vmem:[%s2111 + $0xa0] sm:$0xff]
        %v2123 = vld [vmem:[%s2111 + $0xb0] sm:$0xff]
        %v2124 = vld [vmem:[%s2111 + $0xc0] sm:$0xff]
        %v2125 = vld [vmem:[%s2111 + $0xd0] sm:$0xff]
        %v2126 = vld [vmem:[%s2111 + $0xe0] sm:$0xff]
        %v2127 = vld [vmem:[%s2111 + $0xf0] sm:$0xff]
        %s2128 = sld [smem:[#allocation5]]
        %v2129 = vstv %s2128
        %v2130 = vmul.f32 %v2129, %v2046
        %v2131 = vmul.f32 %v2129, %v2049
        %v2132 = vmul.f32 %v2129, %v2054
        %v2133 = vmul.f32 %v2129, %v2057
        %v2134 = vmul.f32 %v2129, %v2062
        %v2135 = vmul.f32 %v2129, %v2065
        %v2136 = vmul.f32 %v2129, %v2070
        %v2137 = vmul.f32 %v2129, %v2073
        %v2138 = vmul.f32 %v2129, %v2078
        %v2139 = vmul.f32 %v2129, %v2081
        %v2140 = vmul.f32 %v2129, %v2086
        %v2141 = vmul.f32 %v2129, %v2089
        %v2142 = vmul.f32 %v2129, %v2094
        %v2143 = vmul.f32 %v2129, %v2097
        %v2144 = vmul.f32 %v2129, %v2102
        %v2145 = vmul.f32 %v2129, %v2105
        %v2146 = vadd.f32 %v2130, %v2112
        %v2147 = vadd.f32 %v2131, %v2113
        %v2148 = vadd.f32 %v2132, %v2114
        %v2149 = vadd.f32 %v2133, %v2115
        %v2150 = vadd.f32 %v2134, %v2116
        %v2151 = vadd.f32 %v2135, %v2117
        %v2152 = vadd.f32 %v2136, %v2118
        %v2153 = vadd.f32 %v2137, %v2119
        %v2154 = vadd.f32 %v2138, %v2120
        %v2155 = vadd.f32 %v2139, %v2121
        %v2156 = vadd.f32 %v2140, %v2122
        %v2157 = vadd.f32 %v2141, %v2123
        %v2158 = vadd.f32 %v2142, %v2124
        %v2159 = vadd.f32 %v2143, %v2125
        %v2160 = vadd.f32 %v2144, %v2126
        %v2161 = vadd.f32 %v2145, %v2127
        %2162 = vst [vmem:[%s255] sm:$0xff] %v2146
        %2163 = vst [vmem:[%s255 + $0x8] sm:$0xff] %v2147
        %2164 = vst [vmem:[%s255 + $0x10] sm:$0xff] %v2148
        %2165 = vst [vmem:[%s255 + $0x18] sm:$0xff] %v2149
        %2166 = vst [vmem:[%s255 + $0x20] sm:$0xff] %v2150
        %2167 = vst [vmem:[%s255 + $0x28] sm:$0xff] %v2151
        %2168 = vst [vmem:[%s255 + $0x30] sm:$0xff] %v2152
        %2169 = vst [vmem:[%s255 + $0x38] sm:$0xff] %v2153
        %2170 = vst [vmem:[%s255 + $0x40] sm:$0xff] %v2154
        %2171 = vst [vmem:[%s255 + $0x48] sm:$0xff] %v2155
        %2172 = vst [vmem:[%s255 + $0x50] sm:$0xff] %v2156
        %2173 = vst [vmem:[%s255 + $0x58] sm:$0xff] %v2157
        %2174 = vst [vmem:[%s255 + $0x60] sm:$0xff] %v2158
        %2175 = vst [vmem:[%s255 + $0x68] sm:$0xff] %v2159
        %2176 = vst [vmem:[%s255 + $0x70] sm:$0xff] %v2160
        %2177 = vst [vmem:[%s255 + $0x78] sm:$0xff] %v2161
        %s2178 = sand.u32 %s171, 1
        %s2179 = sand.u32 %s171, 1
        %s2180 = smul.addr %s2179, 128
        %s2181 = scalar_lea.vmem [#allocation6], %s2180
        // Predicated region
        $region49: #{self_attention_2d.1} parent=43 // pred_check
          %p2182 = pneg %p181
        $region50: #{self_attention_2d.1} parent=43 // pred_check_branch
          %2184 = sbr.rel (%p2182) target = $region52
        $region51: #{self_attention_2d.1} parent=43 // pred_region
          %s2185 = smul.addr %s22, 32
          %s2186 = sadd.s32 %s23, %s2185
          %s2187 = smul.addr %s2186, 8
          %s2188 = scalar_lea.vmem %s6, %s2187
          // Predicated region
          $region53: #{self_attention_2d.1} parent=51 // pred_check
            _
          $region54: #{self_attention_2d.1} parent=51 // pred_check_branch
            %2190 = sbr.rel (0) target = $region56
          $region55: #{self_attention_2d.1} parent=51 // pred_region
            // Predicated region
            $region57: #{self_attention_2d.1} parent=55 // pred_check
              _
            $region58: #{self_attention_2d.1} parent=55 // pred_check_branch
              %2192 = sbr.rel (0) target = $region60
            $region59: #{self_attention_2d.1} parent=55 // pred_region
              // Predicated region
              $region72: #{self_attention_2d.1} parent=59 // pred_check
                _
              $region73: #{self_attention_2d.1} parent=59 // pred_check_branch
                %2238 = sbr.rel (0) target = $region75
              $region74: #{self_attention_2d.1} parent=59 // pred_region
                loop: start=0, step=1, limit=1
                $region76: #{self_attention_2d.1} parent=74 // loop_pre_header
                  _
                $region77: #{self_attention_2d.1} parent=74 // loop_header
                  %s2240 = sphi 0, %s2244
                  %p2241 = scmp.ge.s32.totalorder %s2240, 1
                  %s2245 = sphi %s2181, %s2181
                  %s2246 = sphi %s2188, %s2188
                $region78: #{self_attention_2d.1} parent=74 // loop_header_branch
                  %2243 = sbr.rel (%p2241) target = $region82
                $region79: #{self_attention_2d.1} parent=74 // loop_body
                  %v2247 = vld [vmem:[%s2245] sm:$0xff]
                  %2248 = vst [vmem:[%s2246] sm:$0xff] %v2247
                  %v2249 = vld [vmem:[%s2245 + $0x8] sm:$0xff]
                  %2250 = vst [vmem:[%s2246 + $0x10] sm:$0xff] %v2249
                  %v2251 = vld [vmem:[%s2245 + $0x10] sm:$0xff]
                  %2252 = vst [vmem:[%s2246 + $0x20] sm:$0xff] %v2251
                  %v2253 = vld [vmem:[%s2245 + $0x18] sm:$0xff]
                  %2254 = vst [vmem:[%s2246 + $0x30] sm:$0xff] %v2253
                  %v2255 = vld [vmem:[%s2245 + $0x20] sm:$0xff]
                  %2256 = vst [vmem:[%s2246 + $0x40] sm:$0xff] %v2255
                  %v2257 = vld [vmem:[%s2245 + $0x28] sm:$0xff]
                  %2258 = vst [vmem:[%s2246 + $0x50] sm:$0xff] %v2257
                  %v2259 = vld [vmem:[%s2245 + $0x30] sm:$0xff]
                  %2260 = vst [vmem:[%s2246 + $0x60] sm:$0xff] %v2259
                  %v2261 = vld [vmem:[%s2245 + $0x38] sm:$0xff]
                  %2262 = vst [vmem:[%s2246 + $0x70] sm:$0xff] %v2261
                  %v2263 = vld [vmem:[%s2245 + $0x40] sm:$0xff]
                  %2264 = vst [vmem:[%s2246 + $0x80] sm:$0xff] %v2263
                  %v2265 = vld [vmem:[%s2245 + $0x48] sm:$0xff]
                  %2266 = vst [vmem:[%s2246 + $0x90] sm:$0xff] %v2265
                  %v2267 = vld [vmem:[%s2245 + $0x50] sm:$0xff]
                  %2268 = vst [vmem:[%s2246 + $0xa0] sm:$0xff] %v2267
                  %v2269 = vld [vmem:[%s2245 + $0x58] sm:$0xff]
                  %2270 = vst [vmem:[%s2246 + $0xb0] sm:$0xff] %v2269
                  %v2271 = vld [vmem:[%s2245 + $0x60] sm:$0xff]
                  %2272 = vst [vmem:[%s2246 + $0xc0] sm:$0xff] %v2271
                  %v2273 = vld [vmem:[%s2245 + $0x68] sm:$0xff]
                  %2274 = vst [vmem:[%s2246 + $0xd0] sm:$0xff] %v2273
                  %v2275 = vld [vmem:[%s2245 + $0x70] sm:$0xff]
                  %2276 = vst [vmem:[%s2246 + $0xe0] sm:$0xff] %v2275
                  %v2277 = vld [vmem:[%s2245 + $0x78] sm:$0xff]
                  %2278 = vst [vmem:[%s2246 + $0xf0] sm:$0xff] %v2277
                $region80: #{self_attention_2d.1} parent=74 // loop_footer
                  %s2244 = sadd.s32 1, %s2240
                $region81: #{self_attention_2d.1} parent=74 // loop_footer_branch
                  %2239 = sbr.rel target = $region77
                $region82: #{self_attention_2d.1} parent=74 // loop_exit
                  _
              $region75: #{self_attention_2d.1} parent=59 // pred_fallthru
                _
              // Predicated region
              $region83: #{self_attention_2d.1} parent=59 // pred_check
                _
              $region84: #{self_attention_2d.1} parent=59 // pred_check_branch
                %2280 = sbr.rel target = $region86
              $region85: #{self_attention_2d.1} parent=59 // pred_region
                _
              $region86: #{self_attention_2d.1} parent=59 // pred_fallthru
                _
            $region60: #{self_attention_2d.1} parent=55 // pred_fallthru
              _
            // Predicated region
            $region61: #{self_attention_2d.1} parent=55 // pred_check
              _
            $region62: #{self_attention_2d.1} parent=55 // pred_check_branch
              %2194 = sbr.rel target = $region64
            $region63: #{self_attention_2d.1} parent=55 // pred_region
              %s2196 = ssub.s32 256, 1
              loop: start=0, step=1, limit=1
              $region65: #{self_attention_2d.1} parent=63 // loop_pre_header
                _
              $region66: #{self_attention_2d.1} parent=63 // loop_header
                %s2198 = sphi 0, %s2202
                %p2199 = scmp.ge.s32.totalorder %s2198, 1
                %s2203 = sphi %s2181, %s2181
                %s2204 = sphi %s2188, %s2188
              $region67: #{self_attention_2d.1} parent=63 // loop_header_branch
                %2201 = sbr.rel (%p2199) target = $region71
              $region68: #{self_attention_2d.1} parent=63 // loop_body
                %v2205 = vld [vmem:[%s2203] sm:%s2196]
                %2206 = vst [vmem:[%s2204] sm:%s2196] %v2205
                %v2207 = vld [vmem:[%s2203 + $0x8] sm:%s2196]
                %2208 = vst [vmem:[%s2204 + $0x10] sm:%s2196] %v2207
                %v2209 = vld [vmem:[%s2203 + $0x10] sm:%s2196]
                %2210 = vst [vmem:[%s2204 + $0x20] sm:%s2196] %v2209
                %v2211 = vld [vmem:[%s2203 + $0x18] sm:%s2196]
                %2212 = vst [vmem:[%s2204 + $0x30] sm:%s2196] %v2211
                %v2213 = vld [vmem:[%s2203 + $0x20] sm:%s2196]
                %2214 = vst [vmem:[%s2204 + $0x40] sm:%s2196] %v2213
                %v2215 = vld [vmem:[%s2203 + $0x28] sm:%s2196]
                %2216 = vst [vmem:[%s2204 + $0x50] sm:%s2196] %v2215
                %v2217 = vld [vmem:[%s2203 + $0x30] sm:%s2196]
                %2218 = vst [vmem:[%s2204 + $0x60] sm:%s2196] %v2217
                %v2219 = vld [vmem:[%s2203 + $0x38] sm:%s2196]
                %2220 = vst [vmem:[%s2204 + $0x70] sm:%s2196] %v2219
                %v2221 = vld [vmem:[%s2203 + $0x40] sm:%s2196]
                %2222 = vst [vmem:[%s2204 + $0x80] sm:%s2196] %v2221
                %v2223 = vld [vmem:[%s2203 + $0x48] sm:%s2196]
                %2224 = vst [vmem:[%s2204 + $0x90] sm:%s2196] %v2223
                %v2225 = vld [vmem:[%s2203 + $0x50] sm:%s2196]
                %2226 = vst [vmem:[%s2204 + $0xa0] sm:%s2196] %v2225
                %v2227 = vld [vmem:[%s2203 + $0x58] sm:%s2196]
                %2228 = vst [vmem:[%s2204 + $0xb0] sm:%s2196] %v2227
                %v2229 = vld [vmem:[%s2203 + $0x60] sm:%s2196]
                %2230 = vst [vmem:[%s2204 + $0xc0] sm:%s2196] %v2229
                %v2231 = vld [vmem:[%s2203 + $0x68] sm:%s2196]
                %2232 = vst [vmem:[%s2204 + $0xd0] sm:%s2196] %v2231
                %v2233 = vld [vmem:[%s2203 + $0x70] sm:%s2196]
                %2234 = vst [vmem:[%s2204 + $0xe0] sm:%s2196] %v2233
                %v2235 = vld [vmem:[%s2203 + $0x78] sm:%s2196]
                %2236 = vst [vmem:[%s2204 + $0xf0] sm:%s2196] %v2235
              $region69: #{self_attention_2d.1} parent=63 // loop_footer
                %s2202 = sadd.s32 1, %s2198
              $region70: #{self_attention_2d.1} parent=63 // loop_footer_branch
                %2197 = sbr.rel target = $region66
              $region71: #{self_attention_2d.1} parent=63 // loop_exit
                _
            $region64: #{self_attention_2d.1} parent=55 // pred_fallthru
              _
          $region56: #{self_attention_2d.1} parent=51 // pred_fallthru
            _
          %2281 = vnop
        $region52: #{self_attention_2d.1} parent=43 // pred_fallthru
          _
      $region44: #{self_attention_2d.1} parent=5 // pred_fallthru
        _
      %p2282 = scmp.le.s32.totalorder 2, %s13
      // Predicated region
      $region87: #{self_attention_2d.1} parent=5 // pred_check
        %p2283 = pneg %p2282
      $region88: #{self_attention_2d.1} parent=5 // pred_check_branch
        %2285 = sbr.rel (%p2283) target = $region90
      $region89: #{self_attention_2d.1} parent=5 // pred_region
        %s2286 = ssub.s32 %s13, 2
        // Predicated region
        $region91: #{self_attention_2d.1} parent=89 // pred_check
          %p2287 = pneg %p187
        $region92: #{self_attention_2d.1} parent=89 // pred_check_branch
          %2289 = sbr.rel (%p2287) target = $region94
        $region93: #{self_attention_2d.1} parent=89 // pred_region
          %s2290 = sand.u32 %s172, 1
          %s2291 = sand.u32 %s172, 1
          %s2292 = smul.addr %s2291, 128
          %s2293 = scalar_lea.vmem [#allocation6], %s2292
        $region94: #{self_attention_2d.1} parent=89 // pred_fallthru
          _
      $region90: #{self_attention_2d.1} parent=5 // pred_fallthru
        _
    $region6: #{self_attention_2d.1} parent=1 // loop_footer
      %s17 = sadd.s32 1, %s13
    $region7: #{self_attention_2d.1} parent=1 // loop_footer_branch
      %12 = sbr.rel target = $region3
    $region8: #{self_attention_2d.1} parent=1 // loop_exit
      _

</llo_original>
